<compile_context>
chip_gen: v7x
topology: tpu7x:2x2x1
jax: 0.10.0
libtpu: 0.0.40
codegen_flags: <defaults>
</compile_context>

<pallas_src>
import jax
import jax.numpy as jnp
from jax import lax
from jax.experimental import pallas as pl
from jax.experimental.pallas import tpu as pltpu
import numpy as np


def fused_mbconv_pallas(x_nchw, params):
    (w1, g1, be1, m1, v1, w2, g2, be2, m2, v2, eps) = params
    N, Cin, H, W = x_nchw.shape
    Cmid = w1.shape[0]
    Cout = w2.shape[0]
    P = H * W
    assert Cin == Cout, "shortcut path requires input_c == out_c (stride==1 config)"

    # -------- host-side prep (tiny, one-time; no activation transposes) --------
    x_flat = x_nchw.reshape(N, Cin, P)                       # NCHW view -> (N, C, H*W)

    inv1 = g1 * lax.rsqrt(v1 + eps)                          # fold BN1 into expand conv
    w1_f = w1 * inv1[:, None, None, None]                    # (Cmid, Cin, 3, 3)
    b1 = (be1 - m1 * inv1).reshape(Cmid, 1)
    w1_r = jnp.transpose(w1_f, (2, 3, 0, 1)).reshape(9, Cmid, Cin)   # tap-major (ky,kx)

    inv2 = g2 * lax.rsqrt(v2 + eps)                          # fold BN2 into 1x1 project
    w2_f = w2[:, :, 0, 0] * inv2[:, None]                    # (Cout, Cmid)
    b2 = (be2 - m2 * inv2).reshape(Cout, 1)

    # per-tap validity masks for SAME zero-padding (compile-time constants, 9 x H*W)
    yy, xx = np.mgrid[0:H, 0:W]
    masks = np.stack([((yy + dy >= 0) & (yy + dy < H) &
                       (xx + dx >= 0) & (xx + dx < W)).reshape(-1)
                      for dy in (-1, 0, 1) for dx in (-1, 0, 1)])
    mask = jnp.asarray(masks, jnp.float32).reshape(9, 1, P)

    # ------------------------------ fused kernel ------------------------------
    def kernel(x_ref, mask_ref, w1_ref, b1_ref, w2_ref, b2_ref, out_ref):
        x = x_ref[0]                                         # (Cin, P) f32, lane-dense
        # 3x3 expand conv (SAME) as 9 shifted matmuls; center tap: no shift, no mask
        acc = jnp.dot(w1_ref[4], x, preferred_element_type=jnp.float32)
        for t in range(9):
            if t == 4:
                continue
            dy, dx = t // 3 - 1, t % 3 - 1
            shift = (-(dy * W + dx)) % P                     # result[p] = x[p + dy*W + dx]
            xs = pltpu.roll(x, shift=shift, axis=1) * mask_ref[t]
            acc = acc + jnp.dot(w1_ref[t], xs, preferred_element_type=jnp.float32)
        h = acc + b1_ref[...]                                # folded BN1 bias
        h = h * jax.nn.sigmoid(h)                            # SiLU (sigmoid -> EUP)
        # 1x1 project conv + folded BN2 bias (Identity activation)
        y = jnp.dot(w2_ref[...], h, preferred_element_type=jnp.float32) + b2_ref[...]
        # residual shortcut (DropPath identity: eval mode / drop_rate == 0)
        out_ref[0] = (y + x).astype(out_ref.dtype)

    flops = N * (2 * 9 * Cmid * Cin * P        # expand conv taps
                 + 2 * Cout * Cmid * P          # 1x1 project
                 + (2 * Cmid + 2 * Cout) * P)   # biases, SiLU mul, residual add
    bytes_accessed = 4 * (N * Cin * P + N * Cout * P            # activations in/out
                          + 9 * Cmid * Cin + Cmid + Cout * Cmid + Cout  # weights/biases
                          + 9 * P)                              # tap masks
    cost = pl.CostEstimate(flops=flops,
                           transcendentals=N * Cmid * P,        # sigmoid
                           bytes_accessed=bytes_accessed)

    out_flat = pl.pallas_call(
        kernel,
        out_shape=jax.ShapeDtypeStruct((N, Cout, P), jnp.float32),
        grid_spec=pltpu.PrefetchScalarGridSpec(
            num_scalar_prefetch=0,
            grid=(N,),
            in_specs=[
                pl.BlockSpec((1, Cin, P), lambda n: (n, 0, 0)),      # activations
                pl.BlockSpec((9, 1, P), lambda n: (0, 0, 0)),        # tap masks (resident)
                pl.BlockSpec((9, Cmid, Cin), lambda n: (0, 0, 0)),   # W1 (BN folded)
                pl.BlockSpec((Cmid, 1), lambda n: (0, 0)),           # bias1
                pl.BlockSpec((Cout, Cmid), lambda n: (0, 0)),        # W2 (BN folded)
                pl.BlockSpec((Cout, 1), lambda n: (0, 0)),           # bias2
            ],
            out_specs=pl.BlockSpec((1, Cout, P), lambda n: (n, 0, 0)),
        ),
        compiler_params=pltpu.CompilerParams(
            dimension_semantics=("parallel",)),
        cost_estimate=cost,
    )(x_flat, mask, w1_r, b1, w2_f, b2)

    return out_flat.reshape(N, Cout, H, W)                   # already NCHW order


def fused_mbconv_reference(x_nchw, params):
    """Pure-JAX reference (matches PyTorch eval-mode forward)."""
    (w1, g1, be1, m1, v1, w2, g2, be2, m2, v2, eps) = params

    def bn(y, g, b, m, v):
        return (y - m[None, :, None, None]) / jnp.sqrt(v + eps)[None, :, None, None] \
            * g[None, :, None, None] + b[None, :, None, None]

    dn = ("NCHW", "OIHW", "NCHW")
    h = lax.conv_general_dilated(x_nchw, w1, (1, 1), "SAME", dimension_numbers=dn)
    h = bn(h, g1, be1, m1, v1)
    h = h * jax.nn.sigmoid(h)
    y = lax.conv_general_dilated(h, w2, (1, 1), "SAME", dimension_numbers=dn)
    y = bn(y, g2, be2, m2, v2)
    return y + x_nchw


if __name__ == "__main__":
    N, Cin, H, W = 2, 4, 16, 16
    expand_ratio = 4
    Cmid, Cout = Cin * expand_ratio, Cin
    eps = 1e-5

    key = jax.random.PRNGKey(0)
    keys = jax.random.split(key, 12)
    x = jax.random.normal(keys[0], (N, Cin, H, W), jnp.float32)

    # deterministic synthetic parameters (shapes from the module __init__)
    w1 = jax.random.normal(keys[1], (Cmid, Cin, 3, 3), jnp.float32) * 0.1
    g1 = jax.random.uniform(keys[2], (Cmid,), jnp.float32, 0.5, 1.5)
    be1 = jax.random.normal(keys[3], (Cmid,), jnp.float32) * 0.1
    m1 = jax.random.normal(keys[4], (Cmid,), jnp.float32) * 0.1
    v1 = jax.random.uniform(keys[5], (Cmid,), jnp.float32, 0.5, 1.5)

    w2 = jax.random.normal(keys[6], (Cout, Cmid, 1, 1), jnp.float32) * 0.1
    g2 = jax.random.uniform(keys[7], (Cout,), jnp.float32, 0.5, 1.5)
    be2 = jax.random.normal(keys[8], (Cout,), jnp.float32) * 0.1
    m2 = jax.random.normal(keys[9], (Cout,), jnp.float32) * 0.1
    v2 = jax.random.uniform(keys[10], (Cout,), jnp.float32, 0.5, 1.5)

    params = (w1, g1, be1, m1, v1, w2, g2, be2, m2, v2, eps)

    out = fused_mbconv_pallas(x, params)
    out = jax.block_until_ready(out)

    ref = jax.block_until_ready(fused_mbconv_reference(x, params))
    np.testing.assert_allclose(np.asarray(out), np.asarray(ref), rtol=1e-3, atol=2e-2)

    print("KERNEL_OK")
</pallas_src>

<mosaic_0001>
module attributes {stable_mosaic.version = 11 : i64} {
  func.func @kernel(%arg0: i32, %arg1: memref<1x4x256xf32, #tpu.memory_space<vmem>>, %arg2: memref<9x1x256xf32, #tpu.memory_space<vmem>>, %arg3: memref<9x16x4xf32, #tpu.memory_space<vmem>>, %arg4: memref<16x1xf32, #tpu.memory_space<vmem>>, %arg5: memref<4x16xf32, #tpu.memory_space<vmem>>, %arg6: memref<4x1xf32, #tpu.memory_space<vmem>>, %arg7: memref<1x4x256xf32, #tpu.memory_space<vmem>>) attributes {dimension_semantics = [#tpu.dimension_semantics<parallel>], iteration_bounds = array<i64: 2>, scalar_prefetch = 0 : i64, scratch_operands = 0 : i64, tpu.core_type = #tpu.core_type<tc>, window_params = [{transform_indices = @transform_0, window_bounds = array<i64: 1, 4, 256>}, {pipeline_mode = #tpu.pipeline_mode<synchronous>, transform_indices = @transform_1, window_bounds = array<i64: 9, 1, 256>}, {pipeline_mode = #tpu.pipeline_mode<synchronous>, transform_indices = @transform_2, window_bounds = array<i64: 9, 16, 4>}, {pipeline_mode = #tpu.pipeline_mode<synchronous>, transform_indices = @transform_3, window_bounds = array<i64: 16, 1>}, {pipeline_mode = #tpu.pipeline_mode<synchronous>, transform_indices = @transform_4, window_bounds = array<i64: 4, 16>}, {pipeline_mode = #tpu.pipeline_mode<synchronous>, transform_indices = @transform_5, window_bounds = array<i64: 4, 1>}, {transform_indices = @transform_6, window_bounds = array<i64: 1, 4, 256>}]} {
    %c0 = arith.constant 0 : index
    %c0_0 = arith.constant 0 : index
    %c0_1 = arith.constant 0 : index
    %0 = vector.load %arg1[%c0, %c0_0, %c0_1] : memref<1x4x256xf32, #tpu.memory_space<vmem>>, vector<1x4x256xf32>
    %1 = vector.shape_cast %0 : vector<1x4x256xf32> to vector<4x256xf32>
    %c4 = arith.constant 4 : index
    %c0_2 = arith.constant 0 : index
    %c0_3 = arith.constant 0 : index
    %2 = vector.load %arg3[%c4, %c0_2, %c0_3] : memref<9x16x4xf32, #tpu.memory_space<vmem>>, vector<1x16x4xf32>
    %3 = vector.shape_cast %2 : vector<1x16x4xf32> to vector<16x4xf32>
    %cst = arith.constant dense<0.000000e+00> : vector<16x256xf32>
    %4 = tpu.matmul %3, %1, %cst {dimension_numbers = #tpu.dot_dimension_numbers<[1], [0], [0], [1], [0, 0, 1, 1], [], []>} : vector<16x4xf32>, vector<4x256xf32>, vector<16x256xf32> -> vector<16x256xf32>
    %c17_i32 = arith.constant 17 : i32
    %5 = tpu.dynamic_rotate %1 by %c17_i32 dim 1 : vector<4x256xf32>, i32 -> vector<4x256xf32>
    %c0_4 = arith.constant 0 : index
    %c0_5 = arith.constant 0 : index
    %c0_6 = arith.constant 0 : index
    %6 = vector.load %arg2[%c0_4, %c0_5, %c0_6] : memref<9x1x256xf32, #tpu.memory_space<vmem>>, vector<1x1x256xf32>
    %7 = vector.shape_cast %6 : vector<1x1x256xf32> to vector<1x256xf32>
    %8 = vector.broadcast %7 : vector<1x256xf32> to vector<4x256xf32>
    %9 = arith.mulf %5, %8 : vector<4x256xf32>
    %c0_7 = arith.constant 0 : index
    %c0_8 = arith.constant 0 : index
    %c0_9 = arith.constant 0 : index
    %10 = vector.load %arg3[%c0_7, %c0_8, %c0_9] : memref<9x16x4xf32, #tpu.memory_space<vmem>>, vector<1x16x4xf32>
    %11 = vector.shape_cast %10 : vector<1x16x4xf32> to vector<16x4xf32>
    %cst_10 = arith.constant dense<0.000000e+00> : vector<16x256xf32>
    %12 = tpu.matmul %11, %9, %cst_10 {dimension_numbers = #tpu.dot_dimension_numbers<[1], [0], [0], [1], [0, 0, 1, 1], [], []>} : vector<16x4xf32>, vector<4x256xf32>, vector<16x256xf32> -> vector<16x256xf32>
    %13 = arith.addf %4, %12 : vector<16x256xf32>
    %c16_i32 = arith.constant 16 : i32
    %14 = tpu.dynamic_rotate %1 by %c16_i32 dim 1 : vector<4x256xf32>, i32 -> vector<4x256xf32>
    %c1 = arith.constant 1 : index
    %c0_11 = arith.constant 0 : index
    %c0_12 = arith.constant 0 : index
    %15 = vector.load %arg2[%c1, %c0_11, %c0_12] : memref<9x1x256xf32, #tpu.memory_space<vmem>>, vector<1x1x256xf32>
    %16 = vector.shape_cast %15 : vector<1x1x256xf32> to vector<1x256xf32>
    %17 = vector.broadcast %16 : vector<1x256xf32> to vector<4x256xf32>
    %18 = arith.mulf %14, %17 : vector<4x256xf32>
    %c1_13 = arith.constant 1 : index
    %c0_14 = arith.constant 0 : index
    %c0_15 = arith.constant 0 : index
    %19 = vector.load %arg3[%c1_13, %c0_14, %c0_15] : memref<9x16x4xf32, #tpu.memory_space<vmem>>, vector<1x16x4xf32>
    %20 = vector.shape_cast %19 : vector<1x16x4xf32> to vector<16x4xf32>
    %cst_16 = arith.constant dense<0.000000e+00> : vector<16x256xf32>
    %21 = tpu.matmul %20, %18, %cst_16 {dimension_numbers = #tpu.dot_dimension_numbers<[1], [0], [0], [1], [0, 0, 1, 1], [], []>} : vector<16x4xf32>, vector<4x256xf32>, vector<16x256xf32> -> vector<16x256xf32>
    %22 = arith.addf %13, %21 : vector<16x256xf32>
    %c15_i32 = arith.constant 15 : i32
    %23 = tpu.dynamic_rotate %1 by %c15_i32 dim 1 : vector<4x256xf32>, i32 -> vector<4x256xf32>
    %c2 = arith.constant 2 : index
    %c0_17 = arith.constant 0 : index
    %c0_18 = arith.constant 0 : index
    %24 = vector.load %arg2[%c2, %c0_17, %c0_18] : memref<9x1x256xf32, #tpu.memory_space<vmem>>, vector<1x1x256xf32>
    %25 = vector.shape_cast %24 : vector<1x1x256xf32> to vector<1x256xf32>
    %26 = vector.broadcast %25 : vector<1x256xf32> to vector<4x256xf32>
    %27 = arith.mulf %23, %26 : vector<4x256xf32>
    %c2_19 = arith.constant 2 : index
    %c0_20 = arith.constant 0 : index
    %c0_21 = arith.constant 0 : index
    %28 = vector.load %arg3[%c2_19, %c0_20, %c0_21] : memref<9x16x4xf32, #tpu.memory_space<vmem>>, vector<1x16x4xf32>
    %29 = vector.shape_cast %28 : vector<1x16x4xf32> to vector<16x4xf32>
    %cst_22 = arith.constant dense<0.000000e+00> : vector<16x256xf32>
    %30 = tpu.matmul %29, %27, %cst_22 {dimension_numbers = #tpu.dot_dimension_numbers<[1], [0], [0], [1], [0, 0, 1, 1], [], []>} : vector<16x4xf32>, vector<4x256xf32>, vector<16x256xf32> -> vector<16x256xf32>
    %31 = arith.addf %22, %30 : vector<16x256xf32>
    %c1_i32 = arith.constant 1 : i32
    %32 = tpu.dynamic_rotate %1 by %c1_i32 dim 1 : vector<4x256xf32>, i32 -> vector<4x256xf32>
    %c3 = arith.constant 3 : index
    %c0_23 = arith.constant 0 : index
    %c0_24 = arith.constant 0 : index
    %33 = vector.load %arg2[%c3, %c0_23, %c0_24] : memref<9x1x256xf32, #tpu.memory_space<vmem>>, vector<1x1x256xf32>
    %34 = vector.shape_cast %33 : vector<1x1x256xf32> to vector<1x256xf32>
    %35 = vector.broadcast %34 : vector<1x256xf32> to vector<4x256xf32>
    %36 = arith.mulf %32, %35 : vector<4x256xf32>
    %c3_25 = arith.constant 3 : index
    %c0_26 = arith.constant 0 : index
    %c0_27 = arith.constant 0 : index
    %37 = vector.load %arg3[%c3_25, %c0_26, %c0_27] : memref<9x16x4xf32, #tpu.memory_space<vmem>>, vector<1x16x4xf32>
    %38 = vector.shape_cast %37 : vector<1x16x4xf32> to vector<16x4xf32>
    %cst_28 = arith.constant dense<0.000000e+00> : vector<16x256xf32>
    %39 = tpu.matmul %38, %36, %cst_28 {dimension_numbers = #tpu.dot_dimension_numbers<[1], [0], [0], [1], [0, 0, 1, 1], [], []>} : vector<16x4xf32>, vector<4x256xf32>, vector<16x256xf32> -> vector<16x256xf32>
    %40 = arith.addf %31, %39 : vector<16x256xf32>
    %c255_i32 = arith.constant 255 : i32
    %41 = tpu.dynamic_rotate %1 by %c255_i32 dim 1 : vector<4x256xf32>, i32 -> vector<4x256xf32>
    %c5 = arith.constant 5 : index
    %c0_29 = arith.constant 0 : index
    %c0_30 = arith.constant 0 : index
    %42 = vector.load %arg2[%c5, %c0_29, %c0_30] : memref<9x1x256xf32, #tpu.memory_space<vmem>>, vector<1x1x256xf32>
    %43 = vector.shape_cast %42 : vector<1x1x256xf32> to vector<1x256xf32>
    %44 = vector.broadcast %43 : vector<1x256xf32> to vector<4x256xf32>
    %45 = arith.mulf %41, %44 : vector<4x256xf32>
    %c5_31 = arith.constant 5 : index
    %c0_32 = arith.constant 0 : index
    %c0_33 = arith.constant 0 : index
    %46 = vector.load %arg3[%c5_31, %c0_32, %c0_33] : memref<9x16x4xf32, #tpu.memory_space<vmem>>, vector<1x16x4xf32>
    %47 = vector.shape_cast %46 : vector<1x16x4xf32> to vector<16x4xf32>
    %cst_34 = arith.constant dense<0.000000e+00> : vector<16x256xf32>
    %48 = tpu.matmul %47, %45, %cst_34 {dimension_numbers = #tpu.dot_dimension_numbers<[1], [0], [0], [1], [0, 0, 1, 1], [], []>} : vector<16x4xf32>, vector<4x256xf32>, vector<16x256xf32> -> vector<16x256xf32>
    %49 = arith.addf %40, %48 : vector<16x256xf32>
    %c241_i32 = arith.constant 241 : i32
    %50 = tpu.dynamic_rotate %1 by %c241_i32 dim 1 : vector<4x256xf32>, i32 -> vector<4x256xf32>
    %c6 = arith.constant 6 : index
    %c0_35 = arith.constant 0 : index
    %c0_36 = arith.constant 0 : index
    %51 = vector.load %arg2[%c6, %c0_35, %c0_36] : memref<9x1x256xf32, #tpu.memory_space<vmem>>, vector<1x1x256xf32>
    %52 = vector.shape_cast %51 : vector<1x1x256xf32> to vector<1x256xf32>
    %53 = vector.broadcast %52 : vector<1x256xf32> to vector<4x256xf32>
    %54 = arith.mulf %50, %53 : vector<4x256xf32>
    %c6_37 = arith.constant 6 : index
    %c0_38 = arith.constant 0 : index
    %c0_39 = arith.constant 0 : index
    %55 = vector.load %arg3[%c6_37, %c0_38, %c0_39] : memref<9x16x4xf32, #tpu.memory_space<vmem>>, vector<1x16x4xf32>
    %56 = vector.shape_cast %55 : vector<1x16x4xf32> to vector<16x4xf32>
    %cst_40 = arith.constant dense<0.000000e+00> : vector<16x256xf32>
    %57 = tpu.matmul %56, %54, %cst_40 {dimension_numbers = #tpu.dot_dimension_numbers<[1], [0], [0], [1], [0, 0, 1, 1], [], []>} : vector<16x4xf32>, vector<4x256xf32>, vector<16x256xf32> -> vector<16x256xf32>
    %58 = arith.addf %49, %57 : vector<16x256xf32>
    %c240_i32 = arith.constant 240 : i32
    %59 = tpu.dynamic_rotate %1 by %c240_i32 dim 1 : vector<4x256xf32>, i32 -> vector<4x256xf32>
    %c7 = arith.constant 7 : index
    %c0_41 = arith.constant 0 : index
    %c0_42 = arith.constant 0 : index
    %60 = vector.load %arg2[%c7, %c0_41, %c0_42] : memref<9x1x256xf32, #tpu.memory_space<vmem>>, vector<1x1x256xf32>
    %61 = vector.shape_cast %60 : vector<1x1x256xf32> to vector<1x256xf32>
    %62 = vector.broadcast %61 : vector<1x256xf32> to vector<4x256xf32>
    %63 = arith.mulf %59, %62 : vector<4x256xf32>
    %c7_43 = arith.constant 7 : index
    %c0_44 = arith.constant 0 : index
    %c0_45 = arith.constant 0 : index
    %64 = vector.load %arg3[%c7_43, %c0_44, %c0_45] : memref<9x16x4xf32, #tpu.memory_space<vmem>>, vector<1x16x4xf32>
    %65 = vector.shape_cast %64 : vector<1x16x4xf32> to vector<16x4xf32>
    %cst_46 = arith.constant dense<0.000000e+00> : vector<16x256xf32>
    %66 = tpu.matmul %65, %63, %cst_46 {dimension_numbers = #tpu.dot_dimension_numbers<[1], [0], [0], [1], [0, 0, 1, 1], [], []>} : vector<16x4xf32>, vector<4x256xf32>, vector<16x256xf32> -> vector<16x256xf32>
    %67 = arith.addf %58, %66 : vector<16x256xf32>
    %c239_i32 = arith.constant 239 : i32
    %68 = tpu.dynamic_rotate %1 by %c239_i32 dim 1 : vector<4x256xf32>, i32 -> vector<4x256xf32>
    %c8 = arith.constant 8 : index
    %c0_47 = arith.constant 0 : index
    %c0_48 = arith.constant 0 : index
    %69 = vector.load %arg2[%c8, %c0_47, %c0_48] : memref<9x1x256xf32, #tpu.memory_space<vmem>>, vector<1x1x256xf32>
    %70 = vector.shape_cast %69 : vector<1x1x256xf32> to vector<1x256xf32>
    %71 = vector.broadcast %70 : vector<1x256xf32> to vector<4x256xf32>
    %72 = arith.mulf %68, %71 : vector<4x256xf32>
    %c8_49 = arith.constant 8 : index
    %c0_50 = arith.constant 0 : index
    %c0_51 = arith.constant 0 : index
    %73 = vector.load %arg3[%c8_49, %c0_50, %c0_51] : memref<9x16x4xf32, #tpu.memory_space<vmem>>, vector<1x16x4xf32>
    %74 = vector.shape_cast %73 : vector<1x16x4xf32> to vector<16x4xf32>
    %cst_52 = arith.constant dense<0.000000e+00> : vector<16x256xf32>
    %75 = tpu.matmul %74, %72, %cst_52 {dimension_numbers = #tpu.dot_dimension_numbers<[1], [0], [0], [1], [0, 0, 1, 1], [], []>} : vector<16x4xf32>, vector<4x256xf32>, vector<16x256xf32> -> vector<16x256xf32>
    %76 = arith.addf %67, %75 : vector<16x256xf32>
    %c0_53 = arith.constant 0 : index
    %c0_54 = arith.constant 0 : index
    %77 = vector.load %arg4[%c0_53, %c0_54] : memref<16x1xf32, #tpu.memory_space<vmem>>, vector<16x1xf32>
    %78 = vector.broadcast %77 : vector<16x1xf32> to vector<16x256xf32>
    %79 = arith.addf %76, %78 : vector<16x256xf32>
    %80 = arith.negf %79 : vector<16x256xf32>
    %81 = math.exp %80 : vector<16x256xf32>
    %cst_55 = arith.constant 1.000000e+00 : f32
    %82 = vector.broadcast %cst_55 : f32 to vector<16x256xf32>
    %83 = arith.addf %82, %81 : vector<16x256xf32>
    %84 = arith.divf %82, %83 : vector<16x256xf32>
    %85 = arith.mulf %79, %84 : vector<16x256xf32>
    %c0_56 = arith.constant 0 : index
    %c0_57 = arith.constant 0 : index
    %86 = vector.load %arg5[%c0_56, %c0_57] : memref<4x16xf32, #tpu.memory_space<vmem>>, vector<4x16xf32>
    %cst_58 = arith.constant dense<0.000000e+00> : vector<4x256xf32>
    %87 = tpu.matmul %86, %85, %cst_58 {dimension_numbers = #tpu.dot_dimension_numbers<[1], [0], [0], [1], [0, 0, 1, 1], [], []>} : vector<4x16xf32>, vector<16x256xf32>, vector<4x256xf32> -> vector<4x256xf32>
    %c0_59 = arith.constant 0 : index
    %c0_60 = arith.constant 0 : index
    %88 = vector.load %arg6[%c0_59, %c0_60] : memref<4x1xf32, #tpu.memory_space<vmem>>, vector<4x1xf32>
    %89 = vector.broadcast %88 : vector<4x1xf32> to vector<4x256xf32>
    %90 = arith.addf %87, %89 : vector<4x256xf32>
    %91 = arith.addf %90, %1 : vector<4x256xf32>
    %c0_61 = arith.constant 0 : index
    %c0_62 = arith.constant 0 : index
    %c0_63 = arith.constant 0 : index
    %92 = vector.load %arg7[%c0_61, %c0_62, %c0_63] : memref<1x4x256xf32, #tpu.memory_space<vmem>>, vector<1x4x256xf32>
    %93 = vector.shape_cast %92 : vector<1x4x256xf32> to vector<4x256xf32>
    %94 = vector.shape_cast %91 : vector<4x256xf32> to vector<1x4x256xf32>
    tpu.vector_store %arg7[%c0_61, %c0_62, %c0_63], %94 {strides = array<i32>} : memref<1x4x256xf32, #tpu.memory_space<vmem>>, vector<1x4x256xf32>,
    return
  }
  func.func @transform_0(%arg0: i32) -> (i32, i32, i32) {
    %c0_i32 = arith.constant 0 : i32
    %c0_i32_0 = arith.constant 0 : i32
    %c0_i32_1 = arith.constant 0 : i32
    return %arg0, %c0_i32, %c0_i32_0 : i32, i32, i32
  }
  func.func @transform_1(%arg0: i32) -> (i32, i32, i32) {
    %c0_i32 = arith.constant 0 : i32
    %c0_i32_0 = arith.constant 0 : i32
    %c0_i32_1 = arith.constant 0 : i32
    %c0_i32_2 = arith.constant 0 : i32
    return %c0_i32, %c0_i32_0, %c0_i32_1 : i32, i32, i32
  }
  func.func @transform_2(%arg0: i32) -> (i32, i32, i32) {
    %c0_i32 = arith.constant 0 : i32
    %c0_i32_0 = arith.constant 0 : i32
    %c0_i32_1 = arith.constant 0 : i32
    %c0_i32_2 = arith.constant 0 : i32
    return %c0_i32, %c0_i32_0, %c0_i32_1 : i32, i32, i32
  }
  func.func @transform_3(%arg0: i32) -> (i32, i32) {
    %c0_i32 = arith.constant 0 : i32
    %c0_i32_0 = arith.constant 0 : i32
    %c0_i32_1 = arith.constant 0 : i32
    return %c0_i32, %c0_i32_0 : i32, i32
  }
  func.func @transform_4(%arg0: i32) -> (i32, i32) {
    %c0_i32 = arith.constant 0 : i32
    %c0_i32_0 = arith.constant 0 : i32
    %c0_i32_1 = arith.constant 0 : i32
    return %c0_i32, %c0_i32_0 : i32, i32
  }
  func.func @transform_5(%arg0: i32) -> (i32, i32) {
    %c0_i32 = arith.constant 0 : i32
    %c0_i32_0 = arith.constant 0 : i32
    %c0_i32_1 = arith.constant 0 : i32
    return %c0_i32, %c0_i32_0 : i32, i32
  }
  func.func @transform_6(%arg0: i32) -> (i32, i32, i32) {
    %c0_i32 = arith.constant 0 : i32
    %c0_i32_0 = arith.constant 0 : i32
    %c0_i32_1 = arith.constant 0 : i32
    return %arg0, %c0_i32, %c0_i32_0 : i32, i32, i32
  }
}

</mosaic_0001>

<llo_original>
// kernel: tpu_custom_call.1
$region0: #{tpu_custom_call.1}
  #allocation0 [shape = 'u32[]', space=smem, size = 0x4, offset = 0x4, fixed_abs, tag = 'smem constant byte address 0x4 - core index']
  #allocation1 [shape = 'u32[144,128]{1,0:T(1,128)}', space=vmem, size = 0x12000, scoped, tag = 'internal scratch']
  %s0 = inlined_call_operand.vmem [shape: f32[2,4,256], index: 0, kind: input, shape index: {}]
  %s1 = inlined_call_operand.vmem [shape: f32[9,1,256], index: 1, kind: input, shape index: {}]
  %s2 = inlined_call_operand.vmem [shape: f32[9,16,4], index: 2, kind: input, shape index: {}]
  %s3 = inlined_call_operand.vmem [shape: f32[16,1], index: 3, kind: input, shape index: {}]
  %s4 = inlined_call_operand.vmem [shape: f32[4,16], index: 4, kind: input, shape index: {}]
  %s5 = inlined_call_operand.vmem [shape: f32[4,1], index: 5, kind: input, shape index: {}]
  %s6 = inlined_call_operand.hbm [shape: f32[2,4,256], index: 6, kind: output, shape index: {}]
  %s7 = sld [smem:[#allocation0]]
  $region57: #{tpu_custom_call.1} parent=0
    _
  %s9 = ssub.s32 1, %s7
  %s10 = scalar_select 0, %s9, %s7
  $region1: #{tpu_custom_call.1} parent=0
    #allocation2 [shape = 'u8[8192]{0}', space=vmem, size = 0x2000, scoped, tag = 'output window, operand 0']
    #allocation3 [shape = 's32[2]{0}', space=sflag, size = 0x8, scoped, tag = 'scoped memory for tpu_custom_call.1']
    %11 = vsyncpa [#allocation3], 0
    %s12 = scalar_lea.sflag [#allocation3], 1
    %13 = vsyncpa %s12, 0
    loop: start=0, step=1, limit=4
    $region2: #{tpu_custom_call.1} parent=1 // loop_pre_header
      _
    $region3: #{tpu_custom_call.1} parent=1 // loop_header
      %s15 = sphi 0, %s19
      %p16 = scmp.ge.s32.totalorder %s15, 4
      %s25 = sphi 0, %s27
      %s28 = sphi 0, %s25
      %s29 = sphi 0, %s28
      %s45 = sphi 0, %s29
      %s49 = sphi 0, %s49
      %s51 = sphi 0, %s49
      %s52 = sphi 0, %s51
      %s66 = sphi 0, %s52
      %s70 = sphi 0, %s70
      %s72 = sphi 0, %s70
      %s73 = sphi 0, %s72
      %s87 = sphi 0, %s73
      %s91 = sphi 0, %s91
      %s93 = sphi 0, %s91
      %s94 = sphi 0, %s93
      %s108 = sphi 0, %s94
      %s112 = sphi 0, %s112
      %s114 = sphi 0, %s112
      %s115 = sphi 0, %s114
      %s129 = sphi 0, %s115
      %s133 = sphi 0, %s133
      %s135 = sphi 0, %s133
      %s136 = sphi 0, %s135
      %s150 = sphi 0, %s136
      %s156 = sphi 0, %s158
      %s159 = sphi 0, %s156
      %s160 = sphi 0, %s159
      %s176 = sphi 0, %s160
    $region4: #{tpu_custom_call.1} parent=1 // loop_header_branch
      %18 = sbr.rel (%p16) target = $region8
    $region5: #{tpu_custom_call.1} parent=1 // loop_body
      %s20 = ssub.s32 %s15, 1
      %s21 = ssub.s32 %s15, 2
      %s22 = sadd.s32 %s15, 1
      %s23 = ssub.s32 %s15, %s22
      %p24 = scmp.eq.s32.totalorder %s23, 0
      %s26 = sadd.s32 %s25, 1
      %s27 = scalar_select %p24, %s25, %s26
      %p30 = pneg %p24
      %p31 = scmp.eq.s32.totalorder %s15, 1
      %p32 = por %p30, %p31
      %p33 = scmp.ne.s32.totalorder %s25, %s28
      %p34 = scmp.eq.s32.totalorder %s15, 0
      %p35 = por %p33, %p34
      %p36 = scmp.ne.s32.totalorder %s25, %s28
      %p37 = scmp.eq.s32.totalorder %s20, 1
      %p38 = por %p36, %p37
      %p39 = scmp.ne.s32.totalorder %s28, %s29
      %p40 = scmp.eq.s32.totalorder %s20, 0
      %p41 = por %p39, %p40
      %p42 = scmp.ne.s32.totalorder %s28, %s29
      %p43 = scmp.eq.s32.totalorder %s21, 1
      %p44 = por %p42, %p43
      %p46 = scmp.ne.s32.totalorder %s29, %s45
      %p47 = scmp.eq.s32.totalorder %s21, 0
      %p48 = por %p46, %p47
      %s50 = sadd.s32 %s49, 1
      %p53 = scmp.eq.s32.totalorder %s15, 1
      %p54 = scmp.ne.s32.totalorder %s49, %s51
      %p55 = scmp.eq.s32.totalorder %s15, 0
      %p56 = por %p54, %p55
      %p57 = scmp.ne.s32.totalorder %s49, %s51
      %p58 = scmp.eq.s32.totalorder %s20, 1
      %p59 = por %p57, %p58
      %p60 = scmp.ne.s32.totalorder %s51, %s52
      %p61 = scmp.eq.s32.totalorder %s20, 0
      %p62 = por %p60, %p61
      %p63 = scmp.ne.s32.totalorder %s51, %s52
      %p64 = scmp.eq.s32.totalorder %s21, 1
      %p65 = por %p63, %p64
      %p67 = scmp.ne.s32.totalorder %s52, %s66
      %p68 = scmp.eq.s32.totalorder %s21, 0
      %p69 = por %p67, %p68
      %s71 = sadd.s32 %s70, 1
      %p74 = scmp.eq.s32.totalorder %s15, 1
      %p75 = scmp.ne.s32.totalorder %s70, %s72
      %p76 = scmp.eq.s32.totalorder %s15, 0
      %p77 = por %p75, %p76
      %p78 = scmp.ne.s32.totalorder %s70, %s72
      %p79 = scmp.eq.s32.totalorder %s20, 1
      %p80 = por %p78, %p79
      %p81 = scmp.ne.s32.totalorder %s72, %s73
      %p82 = scmp.eq.s32.totalorder %s20, 0
      %p83 = por %p81, %p82
      %p84 = scmp.ne.s32.totalorder %s72, %s73
      %p85 = scmp.eq.s32.totalorder %s21, 1
      %p86 = por %p84, %p85
      %p88 = scmp.ne.s32.totalorder %s73, %s87
      %p89 = scmp.eq.s32.totalorder %s21, 0
      %p90 = por %p88, %p89
      %s92 = sadd.s32 %s91, 1
      %p95 = scmp.eq.s32.totalorder %s15, 1
      %p96 = scmp.ne.s32.totalorder %s91, %s93
      %p97 = scmp.eq.s32.totalorder %s15, 0
      %p98 = por %p96, %p97
      %p99 = scmp.ne.s32.totalorder %s91, %s93
      %p100 = scmp.eq.s32.totalorder %s20, 1
      %p101 = por %p99, %p100
      %p102 = scmp.ne.s32.totalorder %s93, %s94
      %p103 = scmp.eq.s32.totalorder %s20, 0
      %p104 = por %p102, %p103
      %p105 = scmp.ne.s32.totalorder %s93, %s94
      %p106 = scmp.eq.s32.totalorder %s21, 1
      %p107 = por %p105, %p106
      %p109 = scmp.ne.s32.totalorder %s94, %s108
      %p110 = scmp.eq.s32.totalorder %s21, 0
      %p111 = por %p109, %p110
      %s113 = sadd.s32 %s112, 1
      %p116 = scmp.eq.s32.totalorder %s15, 1
      %p117 = scmp.ne.s32.totalorder %s112, %s114
      %p118 = scmp.eq.s32.totalorder %s15, 0
      %p119 = por %p117, %p118
      %p120 = scmp.ne.s32.totalorder %s112, %s114
      %p121 = scmp.eq.s32.totalorder %s20, 1
      %p122 = por %p120, %p121
      %p123 = scmp.ne.s32.totalorder %s114, %s115
      %p124 = scmp.eq.s32.totalorder %s20, 0
      %p125 = por %p123, %p124
      %p126 = scmp.ne.s32.totalorder %s114, %s115
      %p127 = scmp.eq.s32.totalorder %s21, 1
      %p128 = por %p126, %p127
      %p130 = scmp.ne.s32.totalorder %s115, %s129
      %p131 = scmp.eq.s32.totalorder %s21, 0
      %p132 = por %p130, %p131
      %s134 = sadd.s32 %s133, 1
      %p137 = scmp.eq.s32.totalorder %s15, 1
      %p138 = scmp.ne.s32.totalorder %s133, %s135
      %p139 = scmp.eq.s32.totalorder %s15, 0
      %p140 = por %p138, %p139
      %p141 = scmp.ne.s32.totalorder %s133, %s135
      %p142 = scmp.eq.s32.totalorder %s20, 1
      %p143 = por %p141, %p142
      %p144 = scmp.ne.s32.totalorder %s135, %s136
      %p145 = scmp.eq.s32.totalorder %s20, 0
      %p146 = por %p144, %p145
      %p147 = scmp.ne.s32.totalorder %s135, %s136
      %p148 = scmp.eq.s32.totalorder %s21, 1
      %p149 = por %p147, %p148
      %p151 = scmp.ne.s32.totalorder %s136, %s150
      %p152 = scmp.eq.s32.totalorder %s21, 0
      %p153 = por %p151, %p152
      %s154 = ssub.s32 %s15, %s22
      %p155 = scmp.eq.s32.totalorder %s154, 0
      %s157 = sadd.s32 %s156, 1
      %s158 = scalar_select %p155, %s156, %s157
      %p161 = pneg %p155
      %p162 = scmp.eq.s32.totalorder %s15, 1
      %p163 = por %p161, %p162
      %p164 = scmp.ne.s32.totalorder %s156, %s159
      %p165 = scmp.eq.s32.totalorder %s15, 0
      %p166 = por %p164, %p165
      %p167 = scmp.ne.s32.totalorder %s156, %s159
      %p168 = scmp.eq.s32.totalorder %s20, 1
      %p169 = por %p167, %p168
      %p170 = scmp.ne.s32.totalorder %s159, %s160
      %p171 = scmp.eq.s32.totalorder %s20, 0
      %p172 = por %p170, %p171
      %p173 = scmp.ne.s32.totalorder %s159, %s160
      %p174 = scmp.eq.s32.totalorder %s21, 1
      %p175 = por %p173, %p174
      %p177 = scmp.ne.s32.totalorder %s160, %s176
      %p178 = scmp.eq.s32.totalorder %s21, 0
      %p179 = por %p177, %p178
      %p180 = scmp.le.s32.totalorder 1, %s15
      %p181 = scmp.lt.s32.totalorder %s15, 3
      %p182 = pnand %p180, %p181
      %p183 = pneg %p182
      // Predicated region
      $region9: #{tpu_custom_call.1} parent=5 // pred_check
        _
      $region10: #{tpu_custom_call.1} parent=5 // pred_check_branch
        %185 = sbr.rel (%p182) target = $region12
      $region11: #{tpu_custom_call.1} parent=5 // pred_region
        %s186 = ssub.s32 %s15, 1
        // Predicated region
        $region13: #{tpu_custom_call.1} parent=11 // pred_check
          %p187 = pneg %p62
        $region14: #{tpu_custom_call.1} parent=11 // pred_check_branch
          %189 = sbr.rel (%p187) target = $region16
        $region15: #{tpu_custom_call.1} parent=11 // pred_region
          _
        $region16: #{tpu_custom_call.1} parent=11 // pred_fallthru
          _
        // Predicated region
        $region17: #{tpu_custom_call.1} parent=11 // pred_check
          %p190 = pneg %p83
        $region18: #{tpu_custom_call.1} parent=11 // pred_check_branch
          %192 = sbr.rel (%p190) target = $region20
        $region19: #{tpu_custom_call.1} parent=11 // pred_region
          _
        $region20: #{tpu_custom_call.1} parent=11 // pred_fallthru
          _
        // Predicated region
        $region21: #{tpu_custom_call.1} parent=11 // pred_check
          %p193 = pneg %p104
        $region22: #{tpu_custom_call.1} parent=11 // pred_check_branch
          %195 = sbr.rel (%p193) target = $region24
        $region23: #{tpu_custom_call.1} parent=11 // pred_region
          _
        $region24: #{tpu_custom_call.1} parent=11 // pred_fallthru
          _
        // Predicated region
        $region25: #{tpu_custom_call.1} parent=11 // pred_check
          %p196 = pneg %p125
        $region26: #{tpu_custom_call.1} parent=11 // pred_check_branch
          %198 = sbr.rel (%p196) target = $region28
        $region27: #{tpu_custom_call.1} parent=11 // pred_region
          _
        $region28: #{tpu_custom_call.1} parent=11 // pred_fallthru
          _
        // Predicated region
        $region29: #{tpu_custom_call.1} parent=11 // pred_check
          %p199 = pneg %p146
        $region30: #{tpu_custom_call.1} parent=11 // pred_check_branch
          %201 = sbr.rel (%p199) target = $region32
        $region31: #{tpu_custom_call.1} parent=11 // pred_region
          _
        $region32: #{tpu_custom_call.1} parent=11 // pred_fallthru
          _
      $region12: #{tpu_custom_call.1} parent=5 // pred_fallthru
        _
      %p202 = scmp.lt.s32.totalorder %s15, 2
      // Predicated region
      $region33: #{tpu_custom_call.1} parent=5 // pred_check
        %p203 = pneg %p202
      $region34: #{tpu_custom_call.1} parent=5 // pred_check_branch
        %205 = sbr.rel (%p203) target = $region36
      $region35: #{tpu_custom_call.1} parent=5 // pred_region
        // Predicated region
        $region37: #{tpu_custom_call.1} parent=35 // pred_check
          %p206 = pneg %p35
        $region38: #{tpu_custom_call.1} parent=35 // pred_check_branch
          %208 = sbr.rel (%p206) target = $region40
        $region39: #{tpu_custom_call.1} parent=35 // pred_region
          %p209 = scmp.lt.s32.totalorder %s15, 1
          %s210 = scalar_select %p209, %s15, 1
          %s211 = smul.addr %s210, 2
          %s212 = smul.addr %s211, 4
          %s213 = scalar_lea.vmem %s0, %s212
        $region40: #{tpu_custom_call.1} parent=35 // pred_fallthru
          _
      $region36: #{tpu_custom_call.1} parent=5 // pred_fallthru
        _
      %p214 = scmp.le.s32.totalorder 1, %s15
      %p215 = scmp.lt.s32.totalorder %s15, 3
      %p216 = pnand %p214, %p215
      %p217 = pneg %p216
      // Predicated region
      $region41: #{tpu_custom_call.1} parent=5 // pred_check
        _
      $region42: #{tpu_custom_call.1} parent=5 // pred_check_branch
        %219 = sbr.rel (%p216) target = $region44
      $region43: #{tpu_custom_call.1} parent=5 // pred_region
        %s220 = ssub.s32 %s15, 1
        %p221 = scmp.lt.s32.totalorder %s20, 1
        %s222 = scalar_select %p221, %s20, 1
        %s223 = smul.addr %s222, 2
        %s224 = smul.addr %s223, 4
        %s225 = scalar_lea.vmem %s0, %s224
        %p226 = pneg %p41
        %p227 = pneg %p38
        %p228 = pneg %p62
        %p229 = pneg %p59
        %p230 = pneg %p83
        %p231 = pneg %p80
        %p232 = pneg %p104
        %p233 = pneg %p101
        %p234 = pneg %p125
        %p235 = pneg %p122
        %p236 = pneg %p146
        %p237 = pneg %p143
        %p238 = pneg %p172
        %p239 = pneg %p169
        %s240 = sand.u32 %s159, 1
        %s241 = scalar_lea.sflag [#allocation3], %s240
        %s242 = sand.u32 %s159, 1
        %s243 = smul.addr %s242, 8
        %s244 = scalar_lea.vmem [#allocation2], %s243
        %p245 = scmp.lt.s32.totalorder %s20, 1
        %s246 = scalar_select %p245, %s20, 1
        %s247 = smul.addr %s246, 2
        %s248 = smul.addr %s247, 4
        %s249 = scalar_lea.vmem %s0, %s248
        %v250 = vld [vmem:[%s249] sm:$0xff]
        %s251 = scalar_lea.vmem %s2, 64
        %v252 = vld [vmem:[%s251] sm:$0xff]
        %v253 = vld [vmem:[%s251 + $0x8] sm:$0xff]
        %v255 = vcombine.high %v250, %v250
        %257 = vrot.lane.b32.xlu0 %v250, 17
        %v258 = vpop.permute.xlu0 %257
        %259 = vrot.lane.b32.xlu0 %v255, 17
        %v260 = vpop.permute.xlu0 %259
        %v261 = vlaneseq
        %v262 = vand.u32 %v261, 127
        %vm263 = vcmp.lt.s32.totalorder %v262, 17
        %v264 = vsel %vm263, %v258, %v260
        %v265 = vsel %vm263, %v260, %v258
        %v266 = vld [vmem:[%s1] sm:$0x3]
        %v268 = vlaneseq
        %v269 = vshrl.u32 %v268, 7
        %v270 = vsub.s32 0, %v269
        %v271 = vrot.slane %v266, %v270
        %v272 = vlaneseq
        %v273 = vshrl.u32 %v272, 7
        %v274 = vsub.s32 1, %v273
        %v275 = vrot.slane %v266, %v274
        %v278 = vmul.f32 %v265, %v271
        %v279 = vmul.f32 %v264, %v275
        %v280 = vld [vmem:[%s2] sm:$0xff]
        %v281 = vld [vmem:[%s2 + $0x8] sm:$0xff]
        %vm282 = vcmask 31744
        %v284 = vsel %vm282, %v280, 0
        %v287 = vsel %vm282, %v281, 0
        %vm289 = vcmask 1043456
        %v291 = vsel %vm289, %v278, 0
        %v294 = vsel %vm289, %v279, 0
        %296 = vmatprep.subr.mxu0 %v294
        %297 = vmatpush1.msra.mxu0 %v291
        %298 = vmatprep.subr.mxu0 0.0
        %299 = vmatpush1.msra.mxu0 0.0
        %300 = vmatprep.subr.mxu0 0.0
        %301 = vmatpush1.msra.mxu0 0.0
        %302 = vmatprep.subr.mxu0 0.0
        %303 = vmatpush1.msra.mxu0 0.0
        %304 = vmatprep.subr.mxu0 0.0
        %305 = vmatpush1.msra.mxu0 0.0
        %306 = vmatprep.subr.mxu0 0.0
        %307 = vmatpush1.msra.mxu0 0.0
        %308 = vmatprep.subr.mxu0 0.0
        %309 = vmatpush1.msra.mxu0 0.0
        %310 = vmatprep.subr.mxu0 0.0
        %311 = vmatpush1.msra.mxu0 0.0
        %312 = vmatprep.subr.mxu0 0.0
        %313 = vmatpush1.msra.mxu0 0.0
        %314 = vmatprep.subr.mxu0 0.0
        %315 = vmatpush1.msra.mxu0 0.0
        %316 = vmatprep.subr.mxu0 0.0
        %317 = vmatpush1.msra.mxu0 0.0
        %318 = vmatprep.subr.mxu0 0.0
        %319 = vmatpush1.msra.mxu0 0.0
        %320 = vmatprep.subr.mxu0 0.0
        %321 = vmatpush1.msra.mxu0 0.0
        %322 = vmatprep.subr.mxu0 0.0
        %323 = vmatpush1.msra.mxu0 0.0
        %324 = vmatprep.subr.mxu0 0.0
        %325 = vmatpush1.msra.mxu0 0.0
        %326 = vmatprep.subr.mxu0 0.0
        %327 = vmatpush1.msra.mxu0 0.0
        %328 = vmatprep.subr.mxu0 0.0
        %329 = vmatpush1.msra.mxu0 0.0
        %330 = vmatprep.subr.mxu0 0.0
        %331 = vmatpush1.msra.mxu0 0.0
        %332 = vmatprep.subr.mxu0 0.0
        %333 = vmatpush1.msra.mxu0 0.0
        %334 = vmatprep.subr.mxu0 0.0
        %335 = vmatpush1.msra.mxu0 0.0
        %336 = vmatprep.subr.mxu0 0.0
        %337 = vmatpush1.msra.mxu0 0.0
        %338 = vmatprep.subr.mxu0 0.0
        %339 = vmatpush1.msra.mxu0 0.0
        %340 = vmatprep.subr.mxu0 0.0
        %341 = vmatpush1.msra.mxu0 0.0
        %342 = vmatprep.subr.mxu0 0.0
        %343 = vmatpush1.msra.mxu0 0.0
        %344 = vmatprep.subr.mxu0 0.0
        %345 = vmatpush1.msra.mxu0 0.0
        %346 = vmatprep.subr.mxu0 0.0
        %347 = vmatpush1.msra.mxu0 0.0
        %348 = vmatprep.subr.mxu0 0.0
        %349 = vmatpush1.msra.mxu0 0.0
        %350 = vmatprep.subr.mxu0 0.0
        %351 = vmatpush1.msra.mxu0 0.0
        %352 = vmatprep.subr.mxu0 0.0
        %353 = vmatpush1.msra.mxu0 0.0
        %354 = vmatprep.subr.mxu0 0.0
        %355 = vmatpush1.msra.mxu0 0.0
        %356 = vmatprep.subr.mxu0 0.0
        %357 = vmatpush1.msra.mxu0 0.0
        %358 = vmatprep.subr.mxu0 0.0
        %359 = vmatpush1.msra.mxu0 0.0
        %360 = vmatprep.mubr.f32.mxu0 0.0
        %361 = vmatmul.mubr.f32.gmra.mrb[0].mxu0 %v284
        %v362 = vpop.f32.mrb[0].mxu0
        %v363 = vadd.f32 0.0, %v362
        %v364 = vpop.f32.mrb[0].mxu0
        %v365 = vadd.f32 0.0, %v364
        %366 = vmatprep.mubr.f32.mxu0 0.0
        %367 = vmatmul.mubr.f32.gmra.mrb[0].mxu0 %v287
        %v368 = vpop.f32.mrb[0].mxu0
        %v369 = vadd.f32 0.0, %v368
        %v370 = vpop.f32.mrb[0].mxu0
        %v371 = vadd.f32 0.0, %v370
        %372 = vdwg.mxu0
        %v374 = vsel %vm282, %v252, 0
        %v377 = vsel %vm282, %v253, 0
        %v379 = vsel %vm289, %v250, 0
        %v381 = vsel %vm289, %v255, 0
        %383 = vmatprep.subr.mxu0 %v381
        %384 = vmatpush1.msra.mxu0 %v379
        %385 = vmatprep.subr.mxu0 0.0
        %386 = vmatpush1.msra.mxu0 0.0
        %387 = vmatprep.subr.mxu0 0.0
        %388 = vmatpush1.msra.mxu0 0.0
        %389 = vmatprep.subr.mxu0 0.0
        %390 = vmatpush1.msra.mxu0 0.0
        %391 = vmatprep.subr.mxu0 0.0
        %392 = vmatpush1.msra.mxu0 0.0
        %393 = vmatprep.subr.mxu0 0.0
        %394 = vmatpush1.msra.mxu0 0.0
        %395 = vmatprep.subr.mxu0 0.0
        %396 = vmatpush1.msra.mxu0 0.0
        %397 = vmatprep.subr.mxu0 0.0
        %398 = vmatpush1.msra.mxu0 0.0
        %399 = vmatprep.subr.mxu0 0.0
        %400 = vmatpush1.msra.mxu0 0.0
        %401 = vmatprep.subr.mxu0 0.0
        %402 = vmatpush1.msra.mxu0 0.0
        %403 = vmatprep.subr.mxu0 0.0
        %404 = vmatpush1.msra.mxu0 0.0
        %405 = vmatprep.subr.mxu0 0.0
        %406 = vmatpush1.msra.mxu0 0.0
        %407 = vmatprep.subr.mxu0 0.0
        %408 = vmatpush1.msra.mxu0 0.0
        %409 = vmatprep.subr.mxu0 0.0
        %410 = vmatpush1.msra.mxu0 0.0
        %411 = vmatprep.subr.mxu0 0.0
        %412 = vmatpush1.msra.mxu0 0.0
        %413 = vmatprep.subr.mxu0 0.0
        %414 = vmatpush1.msra.mxu0 0.0
        %415 = vmatprep.subr.mxu0 0.0
        %416 = vmatpush1.msra.mxu0 0.0
        %417 = vmatprep.subr.mxu0 0.0
        %418 = vmatpush1.msra.mxu0 0.0
        %419 = vmatprep.subr.mxu0 0.0
        %420 = vmatpush1.msra.mxu0 0.0
        %421 = vmatprep.subr.mxu0 0.0
        %422 = vmatpush1.msra.mxu0 0.0
        %423 = vmatprep.subr.mxu0 0.0
        %424 = vmatpush1.msra.mxu0 0.0
        %425 = vmatprep.subr.mxu0 0.0
        %426 = vmatpush1.msra.mxu0 0.0
        %427 = vmatprep.subr.mxu0 0.0
        %428 = vmatpush1.msra.mxu0 0.0
        %429 = vmatprep.subr.mxu0 0.0
        %430 = vmatpush1.msra.mxu0 0.0
        %431 = vmatprep.subr.mxu0 0.0
        %432 = vmatpush1.msra.mxu0 0.0
        %433 = vmatprep.subr.mxu0 0.0
        %434 = vmatpush1.msra.mxu0 0.0
        %435 = vmatprep.subr.mxu0 0.0
        %436 = vmatpush1.msra.mxu0 0.0
        %437 = vmatprep.subr.mxu0 0.0
        %438 = vmatpush1.msra.mxu0 0.0
        %439 = vmatprep.subr.mxu0 0.0
        %440 = vmatpush1.msra.mxu0 0.0
        %441 = vmatprep.subr.mxu0 0.0
        %442 = vmatpush1.msra.mxu0 0.0
        %443 = vmatprep.subr.mxu0 0.0
        %444 = vmatpush1.msra.mxu0 0.0
        %445 = vmatprep.subr.mxu0 0.0
        %446 = vmatpush1.msra.mxu0 0.0
        %447 = vmatprep.mubr.f32.mxu0 0.0
        %448 = vmatmul.mubr.f32.gmra.mrb[0].mxu0 %v374
        %v449 = vpop.f32.mrb[0].mxu0
        %v450 = vadd.f32 %v363, %v449
        %v451 = vpop.f32.mrb[0].mxu0
        %v452 = vadd.f32 %v365, %v451
        %453 = vmatprep.mubr.f32.mxu0 0.0
        %454 = vmatmul.mubr.f32.gmra.mrb[0].mxu0 %v377
        %v455 = vpop.f32.mrb[0].mxu0
        %v456 = vadd.f32 %v369, %v455
        %v457 = vpop.f32.mrb[0].mxu0
        %v458 = vadd.f32 %v371, %v457
        %459 = vdwg.mxu0
        %460 = vrot.lane.b32.xlu0 %v250, 16
        %v461 = vpop.permute.xlu0 %460
        %462 = vrot.lane.b32.xlu0 %v255, 16
        %v463 = vpop.permute.xlu0 %462
        %vm464 = vcmp.lt.s32.totalorder %v262, 16
        %v465 = vsel %vm464, %v461, %v463
        %v466 = vsel %vm464, %v463, %v461
        %s467 = scalar_lea.vmem %s1, 2
        %v468 = vld [vmem:[%s467] sm:$0x3]
        %v470 = vlaneseq
        %v471 = vshrl.u32 %v470, 7
        %v472 = vsub.s32 0, %v471
        %v473 = vrot.slane %v468, %v472
        %v474 = vlaneseq
        %v475 = vshrl.u32 %v474, 7
        %v476 = vsub.s32 1, %v475
        %v477 = vrot.slane %v468, %v476
        %v480 = vmul.f32 %v466, %v473
        %v481 = vmul.f32 %v465, %v477
        %s482 = scalar_lea.vmem %s2, 16
        %v483 = vld [vmem:[%s482] sm:$0xff]
        %v484 = vld [vmem:[%s482 + $0x8] sm:$0xff]
        %v486 = vsel %vm282, %v483, 0
        %v489 = vsel %vm282, %v484, 0
        %v492 = vsel %vm289, %v480, 0
        %v495 = vsel %vm289, %v481, 0
        %497 = vmatprep.subr.mxu0 %v495
        %498 = vmatpush1.msra.mxu0 %v492
        %499 = vmatprep.subr.mxu0 0.0
        %500 = vmatpush1.msra.mxu0 0.0
        %501 = vmatprep.subr.mxu0 0.0
        %502 = vmatpush1.msra.mxu0 0.0
        %503 = vmatprep.subr.mxu0 0.0
        %504 = vmatpush1.msra.mxu0 0.0
        %505 = vmatprep.subr.mxu0 0.0
        %506 = vmatpush1.msra.mxu0 0.0
        %507 = vmatprep.subr.mxu0 0.0
        %508 = vmatpush1.msra.mxu0 0.0
        %509 = vmatprep.subr.mxu0 0.0
        %510 = vmatpush1.msra.mxu0 0.0
        %511 = vmatprep.subr.mxu0 0.0
        %512 = vmatpush1.msra.mxu0 0.0
        %513 = vmatprep.subr.mxu0 0.0
        %514 = vmatpush1.msra.mxu0 0.0
        %515 = vmatprep.subr.mxu0 0.0
        %516 = vmatpush1.msra.mxu0 0.0
        %517 = vmatprep.subr.mxu0 0.0
        %518 = vmatpush1.msra.mxu0 0.0
        %519 = vmatprep.subr.mxu0 0.0
        %520 = vmatpush1.msra.mxu0 0.0
        %521 = vmatprep.subr.mxu0 0.0
        %522 = vmatpush1.msra.mxu0 0.0
        %523 = vmatprep.subr.mxu0 0.0
        %524 = vmatpush1.msra.mxu0 0.0
        %525 = vmatprep.subr.mxu0 0.0
        %526 = vmatpush1.msra.mxu0 0.0
        %527 = vmatprep.subr.mxu0 0.0
        %528 = vmatpush1.msra.mxu0 0.0
        %529 = vmatprep.subr.mxu0 0.0
        %530 = vmatpush1.msra.mxu0 0.0
        %531 = vmatprep.subr.mxu0 0.0
        %532 = vmatpush1.msra.mxu0 0.0
        %533 = vmatprep.subr.mxu0 0.0
        %534 = vmatpush1.msra.mxu0 0.0
        %535 = vmatprep.subr.mxu0 0.0
        %536 = vmatpush1.msra.mxu0 0.0
        %537 = vmatprep.subr.mxu0 0.0
        %538 = vmatpush1.msra.mxu0 0.0
        %539 = vmatprep.subr.mxu0 0.0
        %540 = vmatpush1.msra.mxu0 0.0
        %541 = vmatprep.subr.mxu0 0.0
        %542 = vmatpush1.msra.mxu0 0.0
        %543 = vmatprep.subr.mxu0 0.0
        %544 = vmatpush1.msra.mxu0 0.0
        %545 = vmatprep.subr.mxu0 0.0
        %546 = vmatpush1.msra.mxu0 0.0
        %547 = vmatprep.subr.mxu0 0.0
        %548 = vmatpush1.msra.mxu0 0.0
        %549 = vmatprep.subr.mxu0 0.0
        %550 = vmatpush1.msra.mxu0 0.0
        %551 = vmatprep.subr.mxu0 0.0
        %552 = vmatpush1.msra.mxu0 0.0
        %553 = vmatprep.subr.mxu0 0.0
        %554 = vmatpush1.msra.mxu0 0.0
        %555 = vmatprep.subr.mxu0 0.0
        %556 = vmatpush1.msra.mxu0 0.0
        %557 = vmatprep.subr.mxu0 0.0
        %558 = vmatpush1.msra.mxu0 0.0
        %559 = vmatprep.subr.mxu0 0.0
        %560 = vmatpush1.msra.mxu0 0.0
        %561 = vmatprep.mubr.f32.mxu0 0.0
        %562 = vmatmul.mubr.f32.gmra.mrb[0].mxu0 %v486
        %v563 = vpop.f32.mrb[0].mxu0
        %v564 = vadd.f32 0.0, %v563
        %v565 = vpop.f32.mrb[0].mxu0
        %v566 = vadd.f32 0.0, %v565
        %567 = vmatprep.mubr.f32.mxu0 0.0
        %568 = vmatmul.mubr.f32.gmra.mrb[0].mxu0 %v489
        %v569 = vpop.f32.mrb[0].mxu0
        %v570 = vadd.f32 0.0, %v569
        %v571 = vpop.f32.mrb[0].mxu0
        %v572 = vadd.f32 0.0, %v571
        %573 = vdwg.mxu0
        %v574 = vadd.f32 %v450, %v564
        %v575 = vadd.f32 %v452, %v566
        %v576 = vadd.f32 %v456, %v570
        %v577 = vadd.f32 %v458, %v572
        %578 = vrot.lane.b32.xlu0 %v250, 15
        %v579 = vpop.permute.xlu0 %578
        %580 = vrot.lane.b32.xlu0 %v255, 15
        %v581 = vpop.permute.xlu0 %580
        %vm582 = vcmp.lt.s32.totalorder %v262, 15
        %v583 = vsel %vm582, %v579, %v581
        %v584 = vsel %vm582, %v581, %v579
        %s585 = scalar_lea.vmem %s1, 4
        %v586 = vld [vmem:[%s585] sm:$0x3]
        %v588 = vlaneseq
        %v589 = vshrl.u32 %v588, 7
        %v590 = vsub.s32 0, %v589
        %v591 = vrot.slane %v586, %v590
        %v592 = vlaneseq
        %v593 = vshrl.u32 %v592, 7
        %v594 = vsub.s32 1, %v593
        %v595 = vrot.slane %v586, %v594
        %v598 = vmul.f32 %v584, %v591
        %v599 = vmul.f32 %v583, %v595
        %s600 = scalar_lea.vmem %s2, 32
        %v601 = vld [vmem:[%s600] sm:$0xff]
        %v602 = vld [vmem:[%s600 + $0x8] sm:$0xff]
        %v604 = vsel %vm282, %v601, 0
        %v607 = vsel %vm282, %v602, 0
        %v610 = vsel %vm289, %v598, 0
        %v613 = vsel %vm289, %v599, 0
        %615 = vmatprep.subr.mxu0 %v613
        %616 = vmatpush1.msra.mxu0 %v610
        %617 = vmatprep.subr.mxu0 0.0
        %618 = vmatpush1.msra.mxu0 0.0
        %619 = vmatprep.subr.mxu0 0.0
        %620 = vmatpush1.msra.mxu0 0.0
        %621 = vmatprep.subr.mxu0 0.0
        %622 = vmatpush1.msra.mxu0 0.0
        %623 = vmatprep.subr.mxu0 0.0
        %624 = vmatpush1.msra.mxu0 0.0
        %625 = vmatprep.subr.mxu0 0.0
        %626 = vmatpush1.msra.mxu0 0.0
        %627 = vmatprep.subr.mxu0 0.0
        %628 = vmatpush1.msra.mxu0 0.0
        %629 = vmatprep.subr.mxu0 0.0
        %630 = vmatpush1.msra.mxu0 0.0
        %631 = vmatprep.subr.mxu0 0.0
        %632 = vmatpush1.msra.mxu0 0.0
        %633 = vmatprep.subr.mxu0 0.0
        %634 = vmatpush1.msra.mxu0 0.0
        %635 = vmatprep.subr.mxu0 0.0
        %636 = vmatpush1.msra.mxu0 0.0
        %637 = vmatprep.subr.mxu0 0.0
        %638 = vmatpush1.msra.mxu0 0.0
        %639 = vmatprep.subr.mxu0 0.0
        %640 = vmatpush1.msra.mxu0 0.0
        %641 = vmatprep.subr.mxu0 0.0
        %642 = vmatpush1.msra.mxu0 0.0
        %643 = vmatprep.subr.mxu0 0.0
        %644 = vmatpush1.msra.mxu0 0.0
        %645 = vmatprep.subr.mxu0 0.0
        %646 = vmatpush1.msra.mxu0 0.0
        %647 = vmatprep.subr.mxu0 0.0
        %648 = vmatpush1.msra.mxu0 0.0
        %649 = vmatprep.subr.mxu0 0.0
        %650 = vmatpush1.msra.mxu0 0.0
        %651 = vmatprep.subr.mxu0 0.0
        %652 = vmatpush1.msra.mxu0 0.0
        %653 = vmatprep.subr.mxu0 0.0
        %654 = vmatpush1.msra.mxu0 0.0
        %655 = vmatprep.subr.mxu0 0.0
        %656 = vmatpush1.msra.mxu0 0.0
        %657 = vmatprep.subr.mxu0 0.0
        %658 = vmatpush1.msra.mxu0 0.0
        %659 = vmatprep.subr.mxu0 0.0
        %660 = vmatpush1.msra.mxu0 0.0
        %661 = vmatprep.subr.mxu0 0.0
        %662 = vmatpush1.msra.mxu0 0.0
        %663 = vmatprep.subr.mxu0 0.0
        %664 = vmatpush1.msra.mxu0 0.0
        %665 = vmatprep.subr.mxu0 0.0
        %666 = vmatpush1.msra.mxu0 0.0
        %667 = vmatprep.subr.mxu0 0.0
        %668 = vmatpush1.msra.mxu0 0.0
        %669 = vmatprep.subr.mxu0 0.0
        %670 = vmatpush1.msra.mxu0 0.0
        %671 = vmatprep.subr.mxu0 0.0
        %672 = vmatpush1.msra.mxu0 0.0
        %673 = vmatprep.subr.mxu0 0.0
        %674 = vmatpush1.msra.mxu0 0.0
        %675 = vmatprep.subr.mxu0 0.0
        %676 = vmatpush1.msra.mxu0 0.0
        %677 = vmatprep.subr.mxu0 0.0
        %678 = vmatpush1.msra.mxu0 0.0
        %679 = vmatprep.mubr.f32.mxu0 0.0
        %680 = vmatmul.mubr.f32.gmra.mrb[0].mxu0 %v604
        %v681 = vpop.f32.mrb[0].mxu0
        %v682 = vadd.f32 0.0, %v681
        %v683 = vpop.f32.mrb[0].mxu0
        %v684 = vadd.f32 0.0, %v683
        %685 = vmatprep.mubr.f32.mxu0 0.0
        %686 = vmatmul.mubr.f32.gmra.mrb[0].mxu0 %v607
        %v687 = vpop.f32.mrb[0].mxu0
        %v688 = vadd.f32 0.0, %v687
        %v689 = vpop.f32.mrb[0].mxu0
        %v690 = vadd.f32 0.0, %v689
        %691 = vdwg.mxu0
        %v692 = vadd.f32 %v574, %v682
        %v693 = vadd.f32 %v575, %v684
        %v694 = vadd.f32 %v576, %v688
        %v695 = vadd.f32 %v577, %v690
        %696 = vrot.lane.b32.xlu0 %v250, 1
        %v697 = vpop.permute.xlu0 %696
        %698 = vrot.lane.b32.xlu0 %v255, 1
        %v699 = vpop.permute.xlu0 %698
        %vm700 = vcmp.lt.s32.totalorder %v262, 1
        %v701 = vsel %vm700, %v697, %v699
        %v702 = vsel %vm700, %v699, %v697
        %s703 = scalar_lea.vmem %s1, 6
        %v704 = vld [vmem:[%s703] sm:$0x3]
        %v706 = vlaneseq
        %v707 = vshrl.u32 %v706, 7
        %v708 = vsub.s32 0, %v707
        %v709 = vrot.slane %v704, %v708
        %v710 = vlaneseq
        %v711 = vshrl.u32 %v710, 7
        %v712 = vsub.s32 1, %v711
        %v713 = vrot.slane %v704, %v712
        %v716 = vmul.f32 %v702, %v709
        %v717 = vmul.f32 %v701, %v713
        %s718 = scalar_lea.vmem %s2, 48
        %v719 = vld [vmem:[%s718] sm:$0xff]
        %v720 = vld [vmem:[%s718 + $0x8] sm:$0xff]
        %v722 = vsel %vm282, %v719, 0
        %v725 = vsel %vm282, %v720, 0
        %v728 = vsel %vm289, %v716, 0
        %v731 = vsel %vm289, %v717, 0
        %733 = vmatprep.subr.mxu0 %v731
        %734 = vmatpush1.msra.mxu0 %v728
        %735 = vmatprep.subr.mxu0 0.0
        %736 = vmatpush1.msra.mxu0 0.0
        %737 = vmatprep.subr.mxu0 0.0
        %738 = vmatpush1.msra.mxu0 0.0
        %739 = vmatprep.subr.mxu0 0.0
        %740 = vmatpush1.msra.mxu0 0.0
        %741 = vmatprep.subr.mxu0 0.0
        %742 = vmatpush1.msra.mxu0 0.0
        %743 = vmatprep.subr.mxu0 0.0
        %744 = vmatpush1.msra.mxu0 0.0
        %745 = vmatprep.subr.mxu0 0.0
        %746 = vmatpush1.msra.mxu0 0.0
        %747 = vmatprep.subr.mxu0 0.0
        %748 = vmatpush1.msra.mxu0 0.0
        %749 = vmatprep.subr.mxu0 0.0
        %750 = vmatpush1.msra.mxu0 0.0
        %751 = vmatprep.subr.mxu0 0.0
        %752 = vmatpush1.msra.mxu0 0.0
        %753 = vmatprep.subr.mxu0 0.0
        %754 = vmatpush1.msra.mxu0 0.0
        %755 = vmatprep.subr.mxu0 0.0
        %756 = vmatpush1.msra.mxu0 0.0
        %757 = vmatprep.subr.mxu0 0.0
        %758 = vmatpush1.msra.mxu0 0.0
        %759 = vmatprep.subr.mxu0 0.0
        %760 = vmatpush1.msra.mxu0 0.0
        %761 = vmatprep.subr.mxu0 0.0
        %762 = vmatpush1.msra.mxu0 0.0
        %763 = vmatprep.subr.mxu0 0.0
        %764 = vmatpush1.msra.mxu0 0.0
        %765 = vmatprep.subr.mxu0 0.0
        %766 = vmatpush1.msra.mxu0 0.0
        %767 = vmatprep.subr.mxu0 0.0
        %768 = vmatpush1.msra.mxu0 0.0
        %769 = vmatprep.subr.mxu0 0.0
        %770 = vmatpush1.msra.mxu0 0.0
        %771 = vmatprep.subr.mxu0 0.0
        %772 = vmatpush1.msra.mxu0 0.0
        %773 = vmatprep.subr.mxu0 0.0
        %774 = vmatpush1.msra.mxu0 0.0
        %775 = vmatprep.subr.mxu0 0.0
        %776 = vmatpush1.msra.mxu0 0.0
        %777 = vmatprep.subr.mxu0 0.0
        %778 = vmatpush1.msra.mxu0 0.0
        %779 = vmatprep.subr.mxu0 0.0
        %780 = vmatpush1.msra.mxu0 0.0
        %781 = vmatprep.subr.mxu0 0.0
        %782 = vmatpush1.msra.mxu0 0.0
        %783 = vmatprep.subr.mxu0 0.0
        %784 = vmatpush1.msra.mxu0 0.0
        %785 = vmatprep.subr.mxu0 0.0
        %786 = vmatpush1.msra.mxu0 0.0
        %787 = vmatprep.subr.mxu0 0.0
        %788 = vmatpush1.msra.mxu0 0.0
        %789 = vmatprep.subr.mxu0 0.0
        %790 = vmatpush1.msra.mxu0 0.0
        %791 = vmatprep.subr.mxu0 0.0
        %792 = vmatpush1.msra.mxu0 0.0
        %793 = vmatprep.subr.mxu0 0.0
        %794 = vmatpush1.msra.mxu0 0.0
        %795 = vmatprep.subr.mxu0 0.0
        %796 = vmatpush1.msra.mxu0 0.0
        %797 = vmatprep.mubr.f32.mxu0 0.0
        %798 = vmatmul.mubr.f32.gmra.mrb[0].mxu0 %v722
        %v799 = vpop.f32.mrb[0].mxu0
        %v800 = vadd.f32 0.0, %v799
        %v801 = vpop.f32.mrb[0].mxu0
        %v802 = vadd.f32 0.0, %v801
        %803 = vmatprep.mubr.f32.mxu0 0.0
        %804 = vmatmul.mubr.f32.gmra.mrb[0].mxu0 %v725
        %v805 = vpop.f32.mrb[0].mxu0
        %v806 = vadd.f32 0.0, %v805
        %v807 = vpop.f32.mrb[0].mxu0
        %v808 = vadd.f32 0.0, %v807
        %809 = vdwg.mxu0
        %v810 = vadd.f32 %v692, %v800
        %v811 = vadd.f32 %v693, %v802
        %v812 = vadd.f32 %v694, %v806
        %v813 = vadd.f32 %v695, %v808
        %814 = vrot.lane.b32.xlu0 %v250, 127
        %v815 = vpop.permute.xlu0 %814
        %816 = vrot.lane.b32.xlu0 %v255, 127
        %v817 = vpop.permute.xlu0 %816
        %vm818 = vcmp.lt.s32.totalorder %v262, 127
        %v819 = vsel %vm818, %v815, %v817
        %v820 = vsel %vm818, %v817, %v815
        %s821 = scalar_lea.vmem %s1, 10
        %v822 = vld [vmem:[%s821] sm:$0x3]
        %v824 = vlaneseq
        %v825 = vshrl.u32 %v824, 7
        %v826 = vsub.s32 0, %v825
        %v827 = vrot.slane %v822, %v826
        %v828 = vlaneseq
        %v829 = vshrl.u32 %v828, 7
        %v830 = vsub.s32 1, %v829
        %v831 = vrot.slane %v822, %v830
        %v834 = vmul.f32 %v819, %v827
        %v835 = vmul.f32 %v820, %v831
        %s836 = scalar_lea.vmem %s2, 80
        %v837 = vld [vmem:[%s836] sm:$0xff]
        %v838 = vld [vmem:[%s836 + $0x8] sm:$0xff]
        %v840 = vsel %vm282, %v837, 0
        %v843 = vsel %vm282, %v838, 0
        %v846 = vsel %vm289, %v834, 0
        %v849 = vsel %vm289, %v835, 0
        %851 = vmatprep.subr.mxu0 %v849
        %852 = vmatpush1.msra.mxu0 %v846
        %853 = vmatprep.subr.mxu0 0.0
        %854 = vmatpush1.msra.mxu0 0.0
        %855 = vmatprep.subr.mxu0 0.0
        %856 = vmatpush1.msra.mxu0 0.0
        %857 = vmatprep.subr.mxu0 0.0
        %858 = vmatpush1.msra.mxu0 0.0
        %859 = vmatprep.subr.mxu0 0.0
        %860 = vmatpush1.msra.mxu0 0.0
        %861 = vmatprep.subr.mxu0 0.0
        %862 = vmatpush1.msra.mxu0 0.0
        %863 = vmatprep.subr.mxu0 0.0
        %864 = vmatpush1.msra.mxu0 0.0
        %865 = vmatprep.subr.mxu0 0.0
        %866 = vmatpush1.msra.mxu0 0.0
        %867 = vmatprep.subr.mxu0 0.0
        %868 = vmatpush1.msra.mxu0 0.0
        %869 = vmatprep.subr.mxu0 0.0
        %870 = vmatpush1.msra.mxu0 0.0
        %871 = vmatprep.subr.mxu0 0.0
        %872 = vmatpush1.msra.mxu0 0.0
        %873 = vmatprep.subr.mxu0 0.0
        %874 = vmatpush1.msra.mxu0 0.0
        %875 = vmatprep.subr.mxu0 0.0
        %876 = vmatpush1.msra.mxu0 0.0
        %877 = vmatprep.subr.mxu0 0.0
        %878 = vmatpush1.msra.mxu0 0.0
        %879 = vmatprep.subr.mxu0 0.0
        %880 = vmatpush1.msra.mxu0 0.0
        %881 = vmatprep.subr.mxu0 0.0
        %882 = vmatpush1.msra.mxu0 0.0
        %883 = vmatprep.subr.mxu0 0.0
        %884 = vmatpush1.msra.mxu0 0.0
        %885 = vmatprep.subr.mxu0 0.0
        %886 = vmatpush1.msra.mxu0 0.0
        %887 = vmatprep.subr.mxu0 0.0
        %888 = vmatpush1.msra.mxu0 0.0
        %889 = vmatprep.subr.mxu0 0.0
        %890 = vmatpush1.msra.mxu0 0.0
        %891 = vmatprep.subr.mxu0 0.0
        %892 = vmatpush1.msra.mxu0 0.0
        %893 = vmatprep.subr.mxu0 0.0
        %894 = vmatpush1.msra.mxu0 0.0
        %895 = vmatprep.subr.mxu0 0.0
        %896 = vmatpush1.msra.mxu0 0.0
        %897 = vmatprep.subr.mxu0 0.0
        %898 = vmatpush1.msra.mxu0 0.0
        %899 = vmatprep.subr.mxu0 0.0
        %900 = vmatpush1.msra.mxu0 0.0
        %901 = vmatprep.subr.mxu0 0.0
        %902 = vmatpush1.msra.mxu0 0.0
        %903 = vmatprep.subr.mxu0 0.0
        %904 = vmatpush1.msra.mxu0 0.0
        %905 = vmatprep.subr.mxu0 0.0
        %906 = vmatpush1.msra.mxu0 0.0
        %907 = vmatprep.subr.mxu0 0.0
        %908 = vmatpush1.msra.mxu0 0.0
        %909 = vmatprep.subr.mxu0 0.0
        %910 = vmatpush1.msra.mxu0 0.0
        %911 = vmatprep.subr.mxu0 0.0
        %912 = vmatpush1.msra.mxu0 0.0
        %913 = vmatprep.subr.mxu0 0.0
        %914 = vmatpush1.msra.mxu0 0.0
        %915 = vmatprep.mubr.f32.mxu0 0.0
        %916 = vmatmul.mubr.f32.gmra.mrb[0].mxu0 %v840
        %v917 = vpop.f32.mrb[0].mxu0
        %v918 = vadd.f32 0.0, %v917
        %v919 = vpop.f32.mrb[0].mxu0
        %v920 = vadd.f32 0.0, %v919
        %921 = vmatprep.mubr.f32.mxu0 0.0
        %922 = vmatmul.mubr.f32.gmra.mrb[0].mxu0 %v843
        %v923 = vpop.f32.mrb[0].mxu0
        %v924 = vadd.f32 0.0, %v923
        %v925 = vpop.f32.mrb[0].mxu0
        %v926 = vadd.f32 0.0, %v925
        %927 = vdwg.mxu0
        %v928 = vadd.f32 %v810, %v918
        %v929 = vadd.f32 %v811, %v920
        %v930 = vadd.f32 %v812, %v924
        %v931 = vadd.f32 %v813, %v926
        %932 = vrot.lane.b32.xlu0 %v250, 113
        %v933 = vpop.permute.xlu0 %932
        %934 = vrot.lane.b32.xlu0 %v255, 113
        %v935 = vpop.permute.xlu0 %934
        %vm936 = vcmp.lt.s32.totalorder %v262, 113
        %v937 = vsel %vm936, %v933, %v935
        %v938 = vsel %vm936, %v935, %v933
        %s939 = scalar_lea.vmem %s1, 12
        %v940 = vld [vmem:[%s939] sm:$0x3]
        %v942 = vlaneseq
        %v943 = vshrl.u32 %v942, 7
        %v944 = vsub.s32 0, %v943
        %v945 = vrot.slane %v940, %v944
        %v946 = vlaneseq
        %v947 = vshrl.u32 %v946, 7
        %v948 = vsub.s32 1, %v947
        %v949 = vrot.slane %v940, %v948
        %v952 = vmul.f32 %v937, %v945
        %v953 = vmul.f32 %v938, %v949
        %s954 = scalar_lea.vmem %s2, 96
        %v955 = vld [vmem:[%s954] sm:$0xff]
        %v956 = vld [vmem:[%s954 + $0x8] sm:$0xff]
        %v958 = vsel %vm282, %v955, 0
        %v961 = vsel %vm282, %v956, 0
        %v964 = vsel %vm289, %v952, 0
        %v967 = vsel %vm289, %v953, 0
        %969 = vmatprep.subr.mxu0 %v967
        %970 = vmatpush1.msra.mxu0 %v964
        %971 = vmatprep.subr.mxu0 0.0
        %972 = vmatpush1.msra.mxu0 0.0
        %973 = vmatprep.subr.mxu0 0.0
        %974 = vmatpush1.msra.mxu0 0.0
        %975 = vmatprep.subr.mxu0 0.0
        %976 = vmatpush1.msra.mxu0 0.0
        %977 = vmatprep.subr.mxu0 0.0
        %978 = vmatpush1.msra.mxu0 0.0
        %979 = vmatprep.subr.mxu0 0.0
        %980 = vmatpush1.msra.mxu0 0.0
        %981 = vmatprep.subr.mxu0 0.0
        %982 = vmatpush1.msra.mxu0 0.0
        %983 = vmatprep.subr.mxu0 0.0
        %984 = vmatpush1.msra.mxu0 0.0
        %985 = vmatprep.subr.mxu0 0.0
        %986 = vmatpush1.msra.mxu0 0.0
        %987 = vmatprep.subr.mxu0 0.0
        %988 = vmatpush1.msra.mxu0 0.0
        %989 = vmatprep.subr.mxu0 0.0
        %990 = vmatpush1.msra.mxu0 0.0
        %991 = vmatprep.subr.mxu0 0.0
        %992 = vmatpush1.msra.mxu0 0.0
        %993 = vmatprep.subr.mxu0 0.0
        %994 = vmatpush1.msra.mxu0 0.0
        %995 = vmatprep.subr.mxu0 0.0
        %996 = vmatpush1.msra.mxu0 0.0
        %997 = vmatprep.subr.mxu0 0.0
        %998 = vmatpush1.msra.mxu0 0.0
        %999 = vmatprep.subr.mxu0 0.0
        %1000 = vmatpush1.msra.mxu0 0.0
        %1001 = vmatprep.subr.mxu0 0.0
        %1002 = vmatpush1.msra.mxu0 0.0
        %1003 = vmatprep.subr.mxu0 0.0
        %1004 = vmatpush1.msra.mxu0 0.0
        %1005 = vmatprep.subr.mxu0 0.0
        %1006 = vmatpush1.msra.mxu0 0.0
        %1007 = vmatprep.subr.mxu0 0.0
        %1008 = vmatpush1.msra.mxu0 0.0
        %1009 = vmatprep.subr.mxu0 0.0
        %1010 = vmatpush1.msra.mxu0 0.0
        %1011 = vmatprep.subr.mxu0 0.0
        %1012 = vmatpush1.msra.mxu0 0.0
        %1013 = vmatprep.subr.mxu0 0.0
        %1014 = vmatpush1.msra.mxu0 0.0
        %1015 = vmatprep.subr.mxu0 0.0
        %1016 = vmatpush1.msra.mxu0 0.0
        %1017 = vmatprep.subr.mxu0 0.0
        %1018 = vmatpush1.msra.mxu0 0.0
        %1019 = vmatprep.subr.mxu0 0.0
        %1020 = vmatpush1.msra.mxu0 0.0
        %1021 = vmatprep.subr.mxu0 0.0
        %1022 = vmatpush1.msra.mxu0 0.0
        %1023 = vmatprep.subr.mxu0 0.0
        %1024 = vmatpush1.msra.mxu0 0.0
        %1025 = vmatprep.subr.mxu0 0.0
        %1026 = vmatpush1.msra.mxu0 0.0
        %1027 = vmatprep.subr.mxu0 0.0
        %1028 = vmatpush1.msra.mxu0 0.0
        %1029 = vmatprep.subr.mxu0 0.0
        %1030 = vmatpush1.msra.mxu0 0.0
        %1031 = vmatprep.subr.mxu0 0.0
        %1032 = vmatpush1.msra.mxu0 0.0
        %1033 = vmatprep.mubr.f32.mxu0 0.0
        %1034 = vmatmul.mubr.f32.gmra.mrb[0].mxu0 %v958
        %v1035 = vpop.f32.mrb[0].mxu0
        %v1036 = vadd.f32 0.0, %v1035
        %v1037 = vpop.f32.mrb[0].mxu0
        %v1038 = vadd.f32 0.0, %v1037
        %1039 = vmatprep.mubr.f32.mxu0 0.0
        %1040 = vmatmul.mubr.f32.gmra.mrb[0].mxu0 %v961
        %v1041 = vpop.f32.mrb[0].mxu0
        %v1042 = vadd.f32 0.0, %v1041
        %v1043 = vpop.f32.mrb[0].mxu0
        %v1044 = vadd.f32 0.0, %v1043
        %1045 = vdwg.mxu0
        %v1046 = vadd.f32 %v928, %v1036
        %v1047 = vadd.f32 %v929, %v1038
        %v1048 = vadd.f32 %v930, %v1042
        %v1049 = vadd.f32 %v931, %v1044
        %1050 = vrot.lane.b32.xlu0 %v250, 112
        %v1051 = vpop.permute.xlu0 %1050
        %1052 = vrot.lane.b32.xlu0 %v255, 112
        %v1053 = vpop.permute.xlu0 %1052
        %vm1054 = vcmp.lt.s32.totalorder %v262, 112
        %v1055 = vsel %vm1054, %v1051, %v1053
        %v1056 = vsel %vm1054, %v1053, %v1051
        %s1057 = scalar_lea.vmem %s1, 14
        %v1058 = vld [vmem:[%s1057] sm:$0x3]
        %v1060 = vlaneseq
        %v1061 = vshrl.u32 %v1060, 7
        %v1062 = vsub.s32 0, %v1061
        %v1063 = vrot.slane %v1058, %v1062
        %v1064 = vlaneseq
        %v1065 = vshrl.u32 %v1064, 7
        %v1066 = vsub.s32 1, %v1065
        %v1067 = vrot.slane %v1058, %v1066
        %v1070 = vmul.f32 %v1055, %v1063
        %v1071 = vmul.f32 %v1056, %v1067
        %s1072 = scalar_lea.vmem %s2, 112
        %v1073 = vld [vmem:[%s1072] sm:$0xff]
        %v1074 = vld [vmem:[%s1072 + $0x8] sm:$0xff]
        %v1076 = vsel %vm282, %v1073, 0
        %v1079 = vsel %vm282, %v1074, 0
        %v1082 = vsel %vm289, %v1070, 0
        %v1085 = vsel %vm289, %v1071, 0
        %1087 = vmatprep.subr.mxu0 %v1085
        %1088 = vmatpush1.msra.mxu0 %v1082
        %1089 = vmatprep.subr.mxu0 0.0
        %1090 = vmatpush1.msra.mxu0 0.0
        %1091 = vmatprep.subr.mxu0 0.0
        %1092 = vmatpush1.msra.mxu0 0.0
        %1093 = vmatprep.subr.mxu0 0.0
        %1094 = vmatpush1.msra.mxu0 0.0
        %1095 = vmatprep.subr.mxu0 0.0
        %1096 = vmatpush1.msra.mxu0 0.0
        %1097 = vmatprep.subr.mxu0 0.0
        %1098 = vmatpush1.msra.mxu0 0.0
        %1099 = vmatprep.subr.mxu0 0.0
        %1100 = vmatpush1.msra.mxu0 0.0
        %1101 = vmatprep.subr.mxu0 0.0
        %1102 = vmatpush1.msra.mxu0 0.0
        %1103 = vmatprep.subr.mxu0 0.0
        %1104 = vmatpush1.msra.mxu0 0.0
        %1105 = vmatprep.subr.mxu0 0.0
        %1106 = vmatpush1.msra.mxu0 0.0
        %1107 = vmatprep.subr.mxu0 0.0
        %1108 = vmatpush1.msra.mxu0 0.0
        %1109 = vmatprep.subr.mxu0 0.0
        %1110 = vmatpush1.msra.mxu0 0.0
        %1111 = vmatprep.subr.mxu0 0.0
        %1112 = vmatpush1.msra.mxu0 0.0
        %1113 = vmatprep.subr.mxu0 0.0
        %1114 = vmatpush1.msra.mxu0 0.0
        %1115 = vmatprep.subr.mxu0 0.0
        %1116 = vmatpush1.msra.mxu0 0.0
        %1117 = vmatprep.subr.mxu0 0.0
        %1118 = vmatpush1.msra.mxu0 0.0
        %1119 = vmatprep.subr.mxu0 0.0
        %1120 = vmatpush1.msra.mxu0 0.0
        %1121 = vmatprep.subr.mxu0 0.0
        %1122 = vmatpush1.msra.mxu0 0.0
        %1123 = vmatprep.subr.mxu0 0.0
        %1124 = vmatpush1.msra.mxu0 0.0
        %1125 = vmatprep.subr.mxu0 0.0
        %1126 = vmatpush1.msra.mxu0 0.0
        %1127 = vmatprep.subr.mxu0 0.0
        %1128 = vmatpush1.msra.mxu0 0.0
        %1129 = vmatprep.subr.mxu0 0.0
        %1130 = vmatpush1.msra.mxu0 0.0
        %1131 = vmatprep.subr.mxu0 0.0
        %1132 = vmatpush1.msra.mxu0 0.0
        %1133 = vmatprep.subr.mxu0 0.0
        %1134 = vmatpush1.msra.mxu0 0.0
        %1135 = vmatprep.subr.mxu0 0.0
        %1136 = vmatpush1.msra.mxu0 0.0
        %1137 = vmatprep.subr.mxu0 0.0
        %1138 = vmatpush1.msra.mxu0 0.0
        %1139 = vmatprep.subr.mxu0 0.0
        %1140 = vmatpush1.msra.mxu0 0.0
        %1141 = vmatprep.subr.mxu0 0.0
        %1142 = vmatpush1.msra.mxu0 0.0
        %1143 = vmatprep.subr.mxu0 0.0
        %1144 = vmatpush1.msra.mxu0 0.0
        %1145 = vmatprep.subr.mxu0 0.0
        %1146 = vmatpush1.msra.mxu0 0.0
        %1147 = vmatprep.subr.mxu0 0.0
        %1148 = vmatpush1.msra.mxu0 0.0
        %1149 = vmatprep.subr.mxu0 0.0
        %1150 = vmatpush1.msra.mxu0 0.0
        %1151 = vmatprep.mubr.f32.mxu0 0.0
        %1152 = vmatmul.mubr.f32.gmra.mrb[0].mxu0 %v1076
        %v1153 = vpop.f32.mrb[0].mxu0
        %v1154 = vadd.f32 0.0, %v1153
        %v1155 = vpop.f32.mrb[0].mxu0
        %v1156 = vadd.f32 0.0, %v1155
        %1157 = vmatprep.mubr.f32.mxu0 0.0
        %1158 = vmatmul.mubr.f32.gmra.mrb[0].mxu0 %v1079
        %v1159 = vpop.f32.mrb[0].mxu0
        %v1160 = vadd.f32 0.0, %v1159
        %v1161 = vpop.f32.mrb[0].mxu0
        %v1162 = vadd.f32 0.0, %v1161
        %1163 = vdwg.mxu0
        %v1164 = vadd.f32 %v1046, %v1154
        %v1165 = vadd.f32 %v1047, %v1156
        %v1166 = vadd.f32 %v1048, %v1160
        %v1167 = vadd.f32 %v1049, %v1162
        %1168 = vrot.lane.b32.xlu0 %v250, 111
        %v1169 = vpop.permute.xlu0 %1168
        %1170 = vrot.lane.b32.xlu0 %v255, 111
        %v1171 = vpop.permute.xlu0 %1170
        %vm1172 = vcmp.lt.s32.totalorder %v262, 111
        %v1173 = vsel %vm1172, %v1169, %v1171
        %v1174 = vsel %vm1172, %v1171, %v1169
        %s1175 = scalar_lea.vmem %s1, 16
        %v1176 = vld [vmem:[%s1175] sm:$0x3]
        %v1178 = vlaneseq
        %v1179 = vshrl.u32 %v1178, 7
        %v1180 = vsub.s32 0, %v1179
        %v1181 = vrot.slane %v1176, %v1180
        %v1182 = vlaneseq
        %v1183 = vshrl.u32 %v1182, 7
        %v1184 = vsub.s32 1, %v1183
        %v1185 = vrot.slane %v1176, %v1184
        %v1188 = vmul.f32 %v1173, %v1181
        %v1189 = vmul.f32 %v1174, %v1185
        %s1190 = scalar_lea.vmem %s2, 128
        %v1191 = vld [vmem:[%s1190] sm:$0xff]
        %v1192 = vld [vmem:[%s1190 + $0x8] sm:$0xff]
        %v1194 = vsel %vm282, %v1191, 0
        %v1197 = vsel %vm282, %v1192, 0
        %v1200 = vsel %vm289, %v1188, 0
        %v1203 = vsel %vm289, %v1189, 0
        %1205 = vmatprep.subr.mxu0 %v1203
        %1206 = vmatpush1.msra.mxu0 %v1200
        %1207 = vmatprep.subr.mxu0 0.0
        %1208 = vmatpush1.msra.mxu0 0.0
        %1209 = vmatprep.subr.mxu0 0.0
        %1210 = vmatpush1.msra.mxu0 0.0
        %1211 = vmatprep.subr.mxu0 0.0
        %1212 = vmatpush1.msra.mxu0 0.0
        %1213 = vmatprep.subr.mxu0 0.0
        %1214 = vmatpush1.msra.mxu0 0.0
        %1215 = vmatprep.subr.mxu0 0.0
        %1216 = vmatpush1.msra.mxu0 0.0
        %1217 = vmatprep.subr.mxu0 0.0
        %1218 = vmatpush1.msra.mxu0 0.0
        %1219 = vmatprep.subr.mxu0 0.0
        %1220 = vmatpush1.msra.mxu0 0.0
        %1221 = vmatprep.subr.mxu0 0.0
        %1222 = vmatpush1.msra.mxu0 0.0
        %1223 = vmatprep.subr.mxu0 0.0
        %1224 = vmatpush1.msra.mxu0 0.0
        %1225 = vmatprep.subr.mxu0 0.0
        %1226 = vmatpush1.msra.mxu0 0.0
        %1227 = vmatprep.subr.mxu0 0.0
        %1228 = vmatpush1.msra.mxu0 0.0
        %1229 = vmatprep.subr.mxu0 0.0
        %1230 = vmatpush1.msra.mxu0 0.0
        %1231 = vmatprep.subr.mxu0 0.0
        %1232 = vmatpush1.msra.mxu0 0.0
        %1233 = vmatprep.subr.mxu0 0.0
        %1234 = vmatpush1.msra.mxu0 0.0
        %1235 = vmatprep.subr.mxu0 0.0
        %1236 = vmatpush1.msra.mxu0 0.0
        %1237 = vmatprep.subr.mxu0 0.0
        %1238 = vmatpush1.msra.mxu0 0.0
        %1239 = vmatprep.subr.mxu0 0.0
        %1240 = vmatpush1.msra.mxu0 0.0
        %1241 = vmatprep.subr.mxu0 0.0
        %1242 = vmatpush1.msra.mxu0 0.0
        %1243 = vmatprep.subr.mxu0 0.0
        %1244 = vmatpush1.msra.mxu0 0.0
        %1245 = vmatprep.subr.mxu0 0.0
        %1246 = vmatpush1.msra.mxu0 0.0
        %1247 = vmatprep.subr.mxu0 0.0
        %1248 = vmatpush1.msra.mxu0 0.0
        %1249 = vmatprep.subr.mxu0 0.0
        %1250 = vmatpush1.msra.mxu0 0.0
        %1251 = vmatprep.subr.mxu0 0.0
        %1252 = vmatpush1.msra.mxu0 0.0
        %1253 = vmatprep.subr.mxu0 0.0
        %1254 = vmatpush1.msra.mxu0 0.0
        %1255 = vmatprep.subr.mxu0 0.0
        %1256 = vmatpush1.msra.mxu0 0.0
        %1257 = vmatprep.subr.mxu0 0.0
        %1258 = vmatpush1.msra.mxu0 0.0
        %1259 = vmatprep.subr.mxu0 0.0
        %1260 = vmatpush1.msra.mxu0 0.0
        %1261 = vmatprep.subr.mxu0 0.0
        %1262 = vmatpush1.msra.mxu0 0.0
        %1263 = vmatprep.subr.mxu0 0.0
        %1264 = vmatpush1.msra.mxu0 0.0
        %1265 = vmatprep.subr.mxu0 0.0
        %1266 = vmatpush1.msra.mxu0 0.0
        %1267 = vmatprep.subr.mxu0 0.0
        %1268 = vmatpush1.msra.mxu0 0.0
        %1269 = vmatprep.mubr.f32.mxu0 0.0
        %1270 = vmatmul.mubr.f32.gmra.mrb[0].mxu0 %v1194
        %v1271 = vpop.f32.mrb[0].mxu0
        %v1272 = vadd.f32 0.0, %v1271
        %v1273 = vpop.f32.mrb[0].mxu0
        %v1274 = vadd.f32 0.0, %v1273
        %1275 = vmatprep.mubr.f32.mxu0 0.0
        %1276 = vmatmul.mubr.f32.gmra.mrb[0].mxu0 %v1197
        %v1277 = vpop.f32.mrb[0].mxu0
        %v1278 = vadd.f32 0.0, %v1277
        %v1279 = vpop.f32.mrb[0].mxu0
        %v1280 = vadd.f32 0.0, %v1279
        %1281 = vdwg.mxu0
        %v1282 = vadd.f32 %v1164, %v1272
        %v1283 = vadd.f32 %v1165, %v1274
        %v1284 = vadd.f32 %v1166, %v1278
        %v1285 = vadd.f32 %v1167, %v1280
        %v1286 = vld [vmem:[%s3] sm:$0xff]
        %v1287 = vld [vmem:[%s3 + $0x8] sm:$0xff]
        %1289 = vset.pattern.permute.xlu0 0
        %1290 = vperm.xlu0 %1289, %v1286
        %v1291 = vpop.permute.xlu0 %1290
        %1294 = vset.pattern.permute.xlu0 0
        %1295 = vperm.xlu0 %1294, %v1287
        %v1296 = vpop.permute.xlu0 %1295
        %v1298 = vadd.f32 %v1282, %v1291
        %v1299 = vadd.f32 %v1283, %v1291
        %v1300 = vadd.f32 %v1284, %v1296
        %v1301 = vadd.f32 %v1285, %v1296
        %v1302 = vxor.u32 %v1298, 2147483648
        %v1303 = vxor.u32 %v1299, 2147483648
        %v1304 = vxor.u32 %v1300, 2147483648
        %v1305 = vxor.u32 %v1301, 2147483648
        %v1306 = vmul.f32 %v1302, 1.442695
        %v1307 = vpow.pop %v1306
        %v1308 = vmul.f32 %v1303, 1.442695
        %v1309 = vpow.pop %v1308
        %v1310 = vmul.f32 %v1304, 1.442695
        %v1311 = vpow.pop %v1310
        %v1312 = vmul.f32 %v1305, 1.442695
        %v1313 = vpow.pop %v1312
        %v1314 = vadd.f32 %v1307, 1.0
        %v1315 = vadd.f32 %v1309, 1.0
        %v1316 = vadd.f32 %v1311, 1.0
        %v1317 = vadd.f32 %v1313, 1.0
        %v1318 = vrcp.pop %v1314
        %v1319 = vmul.f32 1.0, %v1318
        %v1320 = vrcp.pop %v1315
        %v1321 = vmul.f32 1.0, %v1320
        %v1322 = vrcp.pop %v1316
        %v1323 = vmul.f32 1.0, %v1322
        %v1324 = vrcp.pop %v1317
        %v1325 = vmul.f32 1.0, %v1324
        %v1326 = vmul.f32 %v1298, %v1319
        %v1327 = vmul.f32 %v1299, %v1321
        %v1328 = vmul.f32 %v1300, %v1323
        %v1329 = vmul.f32 %v1301, %v1325
        %v1330 = vld [vmem:[%s4] sm:$0xf]
        %v1331 = vld [vmem:[%s5] sm:$0xf]
        %1333 = vset.pattern.permute.xlu0 0
        %1334 = vperm.xlu0 %1333, %v1331
        %v1335 = vpop.permute.xlu0 %1334
        %vm1337 = vcmask 130048
        %v1339 = vsel %vm1337, %v1330, 0
        %1341 = vmatprep.subr.mxu0 %v1327
        %1342 = vmatpush1.msra.mxu0 %v1326
        %1343 = vmatprep.subr.mxu0 %v1329
        %1344 = vmatpush1.msra.mxu0 %v1328
        %1345 = vmatprep.subr.mxu0 0.0
        %1346 = vmatpush1.msra.mxu0 0.0
        %1347 = vmatprep.subr.mxu0 0.0
        %1348 = vmatpush1.msra.mxu0 0.0
        %1349 = vmatprep.subr.mxu0 0.0
        %1350 = vmatpush1.msra.mxu0 0.0
        %1351 = vmatprep.subr.mxu0 0.0
        %1352 = vmatpush1.msra.mxu0 0.0
        %1353 = vmatprep.subr.mxu0 0.0
        %1354 = vmatpush1.msra.mxu0 0.0
        %1355 = vmatprep.subr.mxu0 0.0
        %1356 = vmatpush1.msra.mxu0 0.0
        %1357 = vmatprep.subr.mxu0 0.0
        %1358 = vmatpush1.msra.mxu0 0.0
        %1359 = vmatprep.subr.mxu0 0.0
        %1360 = vmatpush1.msra.mxu0 0.0
        %1361 = vmatprep.subr.mxu0 0.0
        %1362 = vmatpush1.msra.mxu0 0.0
        %1363 = vmatprep.subr.mxu0 0.0
        %1364 = vmatpush1.msra.mxu0 0.0
        %1365 = vmatprep.subr.mxu0 0.0
        %1366 = vmatpush1.msra.mxu0 0.0
        %1367 = vmatprep.subr.mxu0 0.0
        %1368 = vmatpush1.msra.mxu0 0.0
        %1369 = vmatprep.subr.mxu0 0.0
        %1370 = vmatpush1.msra.mxu0 0.0
        %1371 = vmatprep.subr.mxu0 0.0
        %1372 = vmatpush1.msra.mxu0 0.0
        %1373 = vmatprep.subr.mxu0 0.0
        %1374 = vmatpush1.msra.mxu0 0.0
        %1375 = vmatprep.subr.mxu0 0.0
        %1376 = vmatpush1.msra.mxu0 0.0
        %1377 = vmatprep.subr.mxu0 0.0
        %1378 = vmatpush1.msra.mxu0 0.0
        %1379 = vmatprep.subr.mxu0 0.0
        %1380 = vmatpush1.msra.mxu0 0.0
        %1381 = vmatprep.subr.mxu0 0.0
        %1382 = vmatpush1.msra.mxu0 0.0
        %1383 = vmatprep.subr.mxu0 0.0
        %1384 = vmatpush1.msra.mxu0 0.0
        %1385 = vmatprep.subr.mxu0 0.0
        %1386 = vmatpush1.msra.mxu0 0.0
        %1387 = vmatprep.subr.mxu0 0.0
        %1388 = vmatpush1.msra.mxu0 0.0
        %1389 = vmatprep.subr.mxu0 0.0
        %1390 = vmatpush1.msra.mxu0 0.0
        %1391 = vmatprep.subr.mxu0 0.0
        %1392 = vmatpush1.msra.mxu0 0.0
        %1393 = vmatprep.subr.mxu0 0.0
        %1394 = vmatpush1.msra.mxu0 0.0
        %1395 = vmatprep.subr.mxu0 0.0
        %1396 = vmatpush1.msra.mxu0 0.0
        %1397 = vmatprep.subr.mxu0 0.0
        %1398 = vmatpush1.msra.mxu0 0.0
        %1399 = vmatprep.subr.mxu0 0.0
        %1400 = vmatpush1.msra.mxu0 0.0
        %1401 = vmatprep.subr.mxu0 0.0
        %1402 = vmatpush1.msra.mxu0 0.0
        %1403 = vmatprep.subr.mxu0 0.0
        %1404 = vmatpush1.msra.mxu0 0.0
        %1405 = vmatprep.mubr.f32.mxu0 0.0
        %1406 = vmatmul.mubr.f32.gmra.mrb[0].mxu0 %v1339
        %v1407 = vpop.f32.mrb[0].mxu0
        %v1408 = vadd.f32 %v1335, %v1407
        %v1409 = vpop.f32.mrb[0].mxu0
        %v1410 = vadd.f32 %v1335, %v1409
        %1411 = vdwg.mxu0
        %v1412 = vadd.f32 %v1408, %v250
        %v1413 = vadd.f32 %v1410, %v255
        %v1416 = vcombine.low %v1412, %v1413
        %1418 = vst [vmem:[%s244] sm:$0xff] %v1416
        %s1419 = sand.u32 %s159, 1
        %s1420 = scalar_lea.sflag [#allocation3], %s1419
        %s1421 = sand.u32 %s159, 1
        %s1422 = smul.addr %s1421, 8
        %s1423 = scalar_lea.vmem [#allocation2], %s1422
        // Predicated region
        $region45: #{tpu_custom_call.1} parent=43 // pred_check
          %p1424 = pneg %p169
        $region46: #{tpu_custom_call.1} parent=43 // pred_check_branch
          %1426 = sbr.rel (%p1424) target = $region48
        $region47: #{tpu_custom_call.1} parent=43 // pred_region
          %s1428 = ssub.s32 128, 128
          %1429 = vsyncadd %s1420, %s1428
          %s1430 = smul.addr %s20, 2
          %s1431 = smul.addr %s1430, 64
          %s1432 = scalar_lea.hbm %s6, %s1431
          %s1434 = sshll.u32 %s1423, 4
          %s1435 = int_to_ptr.vmem [resolvable:$true] %s1434
          %1437 = dma.vmem_to_hbm [thread:$0]  %s1435, 128, %s1432, %s1420
        $region48: #{tpu_custom_call.1} parent=43 // pred_fallthru
          _
      $region44: #{tpu_custom_call.1} parent=5 // pred_fallthru
        _
      %p1438 = scmp.le.s32.totalorder 2, %s15
      // Predicated region
      $region49: #{tpu_custom_call.1} parent=5 // pred_check
        %p1439 = pneg %p1438
      $region50: #{tpu_custom_call.1} parent=5 // pred_check_branch
        %1441 = sbr.rel (%p1439) target = $region52
      $region51: #{tpu_custom_call.1} parent=5 // pred_region
        %s1442 = ssub.s32 %s15, 2
        // Predicated region
        $region53: #{tpu_custom_call.1} parent=51 // pred_check
          %p1443 = pneg %p175
        $region54: #{tpu_custom_call.1} parent=51 // pred_check_branch
          %1445 = sbr.rel (%p1443) target = $region56
        $region55: #{tpu_custom_call.1} parent=51 // pred_region
          %s1446 = sand.u32 %s160, 1
          %s1447 = scalar_lea.sflag [#allocation3], %s1446
          %s1448 = sand.u32 %s160, 1
          %s1449 = smul.addr %s1448, 8
          %s1450 = scalar_lea.vmem [#allocation2], %s1449
          %1451 = dma.done %s1447, 128
        $region56: #{tpu_custom_call.1} parent=51 // pred_fallthru
          _
      $region52: #{tpu_custom_call.1} parent=5 // pred_fallthru
        _
    $region6: #{tpu_custom_call.1} parent=1 // loop_footer
      %s19 = sadd.s32 1, %s15
    $region7: #{tpu_custom_call.1} parent=1 // loop_footer_branch
      %14 = sbr.rel target = $region3
    $region8: #{tpu_custom_call.1} parent=1 // loop_exit
      _
    %1452 = vsyncpa [#allocation3], 1
    %s1453 = scalar_lea.sflag [#allocation3], 1
    %1454 = vsyncpa %s1453, 1

</llo_original>
